<compile_context>
chip_gen: v5e
topology: v5e:2x2
jax: 0.10.0
libtpu: 0.0.40
codegen_flags: <defaults>
</compile_context>

<pallas_src>
import math
import numpy as np
import jax
import jax.numpy as jnp
from jax.experimental import pallas as pl
from jax.experimental.pallas import tpu as pltpu

# ---- hyper-parameters (Emotion_Encoder.__init__, small TPU-friendly sizes) -------
B, S = 2, 8            # batch, sequence length
T = B * S              # flattened rows (batch*seq)
E, H = 32, 32          # embedding_size, hidden_size
L = 2                  # num_layers
NH = 2                 # num_heads
KD, VD = 32, 32        # total_key_depth, total_value_depth (divisible by NH)
F = 64                 # filter_size
DK, DV = KD // NH, VD // NH
QKVW = 2 * KD + VD     # fused q|k|v projection width
QUERY_SCALE = DK ** -0.5
EPS = 1e-6             # EmpDG LayerNorm eps (added to the *std*, not the var)
NEG_INF = -1e18
ACT_W = E + T          # per-call activation slab width: [x | attention bias]

# ---- packed-parameter slab layout (static Python row offsets) --------------------
# narrow slab `w32` : lane width 32 (= H)
R32_WEMB = 0                         # [E, H]    embedding_proj weight
R32_TIME = R32_WEMB + E              # [T, H]    timing signal, pre-tiled over batch
R32_WO   = R32_TIME + T              # L x [VD, H]  attention output projection
R32_C2W  = R32_WO + L * VD           # L x [3F, H]  conv2 taps (prev|cur|next on rows)
W32_ROWS = R32_C2W + L * 3 * F       # = 496

# wide slab `w128` : lane width 128
R128_WQKV = 0                        # L x [H, QKVW] fused (scaled, LN-folded) q|k|v
R128_C1W  = R128_WQKV + L * H        # L x [3H, F]   conv1 taps
R128_VEC  = R128_C1W + L * 3 * H     # L x 8 rows: qkv_bias | ln2g | ln2b | c1b | c2b | pad
R128_FIN  = R128_VEC + 8 * L         # 2 rows: final LN gamma, beta
W128_ROWS = R128_FIN + 8             # = 280


# ------------------------------------ kernel --------------------------------------
def emotion_encoder_kernel(act_ref, w128_ref, w32_ref, out_ref):
    x = act_ref[:, 0:E]                    # [T, E]  flattened (batch*seq) rows
    abias = act_ref[:, E:E + T]            # [T, T]  additive attention bias (0 / -1e18)

    # embedding_proj (no bias) + timing signal (pre-tiled to [T, H] at pack time)
    h = (jnp.dot(x, w32_ref[R32_WEMB:R32_WEMB + E, :], preferred_element_type=jnp.float32)
         + w32_ref[R32_TIME:R32_TIME + T, :])

    # conv boundary masks: zero the out-of-sequence neighbour tap at sequence edges
    row = jax.lax.broadcasted_iota(jnp.int32, (T, 1), 0)
    not_first = (row % S) != 0
    not_last = (row % S) != (S - 1)

    def shift_prev(z):   # y[t] = z[t-1] within a sequence, 0 at t == 0      (XLU roll)
        return jnp.where(not_first, pltpu.roll(z, 1, axis=0), 0.0)

    def shift_next(z):   # y[t] = z[t+1] within a sequence, 0 at t == S-1    (XLU roll)
        return jnp.where(not_last, pltpu.roll(z, T - 1, axis=0), 0.0)

    def normalize(z):    # EmpDG LayerNorm core: (x - mean) / (unbiased std + eps)
        mean = jnp.mean(z, axis=-1, keepdims=True)
        var = jnp.sum((z - mean) ** 2, axis=-1, keepdims=True) / (z.shape[-1] - 1)
        return (z - mean) * pl.reciprocal(jnp.sqrt(var) + EPS)   # exact reciprocal here

    for l in range(L):                       # Python-unrolled (LLO visibility)
        vb = R128_VEC + 8 * l

        # ---------------- multi-head self-attention --------------------------------
        # attention-LN gamma/beta and QUERY_SCALE are folded into wqkv / qkv_bias.
        xhat = normalize(h)
        qkv = (jnp.dot(xhat,
                       w128_ref[R128_WQKV + H * l:R128_WQKV + H * (l + 1), 0:QKVW],
                       preferred_element_type=jnp.float32)
               + w128_ref[vb:vb + 1, 0:QKVW])                       # [T, 2*KD+VD]
        ctxs = []
        for hd in range(NH):                 # Python-unrolled
            qs = qkv[:, hd * DK:(hd + 1) * DK]
            ks = qkv[:, KD + hd * DK:KD + (hd + 1) * DK]
            vs = qkv[:, 2 * KD + hd * DV:2 * KD + (hd + 1) * DV]
            logits = jax.lax.dot_general(qs, ks, (((1,), (1,)), ((), ())),
                                         preferred_element_type=jnp.float32) + abias
            logits = logits - jnp.max(logits, axis=-1, keepdims=True)
            p = jnp.exp(logits)
            # approx reciprocal -> EUP vrcp slot (softmax only; LayerNorm stays exact)
            p = p * pl.reciprocal(jnp.sum(p, axis=-1, keepdims=True), approx=True)
            ctxs.append(jnp.dot(p, vs, preferred_element_type=jnp.float32))   # [T, DV]
        ctx = jnp.concatenate(ctxs, axis=-1)  # [T, VD] lane concat -> single Wo push
        h = h + jnp.dot(ctx, w32_ref[R32_WO + VD * l:R32_WO + VD * (l + 1), :],
                        preferred_element_type=jnp.float32)          # residual (dropout=id)

        # ---------------- position-wise FFN ('cc': two kernel-3 convs) -------------
        # NOTE: EmpDG applies ReLU after EVERY conv layer, including the last one.
        xn2 = (w128_ref[vb + 1:vb + 2, 0:H] * normalize(h)
               + w128_ref[vb + 2:vb + 3, 0:H])
        slab1 = jnp.concatenate([shift_prev(xn2), xn2, shift_next(xn2)], axis=-1)  # [T, 3H]
        f = jnp.maximum(
            jnp.dot(slab1,
                    w128_ref[R128_C1W + 3 * H * l:R128_C1W + 3 * H * (l + 1), 0:F],
                    preferred_element_type=jnp.float32)
            + w128_ref[vb + 3:vb + 4, 0:F], 0.0)
        # (v5e note: slab2 spans 192 lanes = two vregs; if its concat lowers to masked
        #  copy chains there, split conv2 back into three K=64 accumulating matmuls.)
        slab2 = jnp.concatenate([shift_prev(f), f, shift_next(f)], axis=-1)        # [T, 3F]
        f = jnp.maximum(
            jnp.dot(slab2,
                    w32_ref[R32_C2W + 3 * F * l:R32_C2W + 3 * F * (l + 1), :],
                    preferred_element_type=jnp.float32)
            + w128_ref[vb + 4:vb + 5, 0:H], 0.0)
        h = h + f                                                     # residual (dropout=id)

    # final LayerNorm
    out_ref[...] = (w128_ref[R128_FIN:R128_FIN + 1, 0:H] * normalize(h)
                    + w128_ref[R128_FIN + 1:R128_FIN + 2, 0:H])


# --------------------------- host-side parameter packing --------------------------
def pack_params(p):
    """Pack the 18 parameter tensors into two contiguous slabs (2 param DMAs).

    Exact pack-time folds:
      * QUERY_SCALE into the wq columns of the fused QKV weight,
      * attention-LN gamma into the QKV weight rows,
      * attention-LN beta into a constant qkv bias row (beta @ Wqkv).
    The conv-LN gamma/beta stay in-kernel (folding beta would be wrong at sequence
    boundaries because the conv shifts zero the neighbour taps).
    """
    # narrow slab: lane width 32
    w32 = jnp.concatenate(
        [p['wemb'], jnp.tile(p['timing'], (B, 1))]
        + [p['wo'][l] for l in range(L)]
        + [p['c2w'][l].reshape(3 * F, H) for l in range(L)], axis=0).astype(jnp.float32)
    assert w32.shape == (W32_ROWS, H)

    # wide slab: lane width 128
    def pad128(m):
        return jnp.pad(m, ((0, 0), (0, 128 - m.shape[-1])))

    wqkv_blocks, c1_blocks, vec_blocks = [], [], []
    for l in range(L):
        wcat = jnp.concatenate([p['wq'][l] * QUERY_SCALE, p['wk'][l], p['wv'][l]], axis=-1)
        wqkv_blocks.append(pad128(p['ln1g'][l][:, None] * wcat))       # gamma-folded [H,96]
        c1_blocks.append(pad128(p['c1w'][l].reshape(3 * H, F)))
        qkv_bias = p['ln1b'][l][None, :] @ wcat                         # beta-folded [1,96]
        vec = jnp.zeros((8, 128), jnp.float32)
        vec = vec.at[0, :QKVW].set(qkv_bias[0])
        vec = vec.at[1, :H].set(p['ln2g'][l])
        vec = vec.at[2, :H].set(p['ln2b'][l])
        vec = vec.at[3, :F].set(p['c1b'][l])
        vec = vec.at[4, :H].set(p['c2b'][l])
        vec_blocks.append(vec)
    fin = jnp.zeros((8, 128), jnp.float32)
    fin = fin.at[0, :H].set(p['lnfg'][0])
    fin = fin.at[1, :H].set(p['lnfb'][0])
    w128 = jnp.concatenate(wqkv_blocks + c1_blocks + vec_blocks + [fin],
                           axis=0).astype(jnp.float32)
    assert w128.shape == (W128_ROWS, 128)
    return {'w128': w128, 'w32': w32}


# --------------------------------- wrapper -----------------------------------------
def emotion_encoder(inputs, mask, packed):
    """inputs [B,S,E]; mask [B,1,S] (1.0 = PAD); packed = pack_params(params)."""
    x2 = inputs.reshape(T, E)
    # additive attention bias over the flattened rows:
    # block-diagonal (no cross-batch attention) + key padding, encoded as 0 / -1e18.
    block_off = (np.arange(T)[:, None] // S) != (np.arange(T)[None, :] // S)   # static
    blocked = jnp.asarray(block_off) | (mask.reshape(1, T) > 0.0)
    abias = jnp.where(blocked, NEG_INF, 0.0).astype(jnp.float32)               # [T, T]
    acts = jnp.concatenate([x2, abias], axis=-1)                               # [T, E+T]

    vmem = pl.BlockSpec(memory_space=pltpu.MemorySpace.VMEM)
    out = pl.pallas_call(
        emotion_encoder_kernel,
        out_shape=jax.ShapeDtypeStruct((T, H), jnp.float32),
        in_specs=[vmem, vmem, vmem],
        out_specs=vmem,
    )(acts, packed['w128'], packed['w32'])
    return out.reshape(B, S, H)


# ----------------------------- params / reference ----------------------------------
def gen_timing_signal(length, channels, min_timescale=1.0, max_timescale=1.0e4):
    position = np.arange(length, dtype=np.float64)
    num_timescales = channels // 2
    log_inc = math.log(float(max_timescale) / float(min_timescale)) / (float(num_timescales) - 1)
    inv_timescales = min_timescale * np.exp(np.arange(num_timescales, dtype=np.float64) * -log_inc)
    scaled_time = position[:, None] * inv_timescales[None, :]
    signal = np.concatenate([np.sin(scaled_time), np.cos(scaled_time)], axis=1)
    signal = np.pad(signal, [[0, 0], [0, channels % 2]], mode='constant')
    return jnp.asarray(signal, dtype=jnp.float32)   # [length, channels]


def init_params(key):
    keys = jax.random.split(key, 9)
    nrm = lambda k, shape, s=0.05: (s * jax.random.normal(k, shape)).astype(jnp.float32)
    return {
        'timing': gen_timing_signal(S, H),
        'wemb': nrm(keys[0], (E, H)),
        'ln1g': jnp.ones((L, H), jnp.float32), 'ln1b': jnp.zeros((L, H), jnp.float32),
        'wq': nrm(keys[1], (L, H, KD)), 'wk': nrm(keys[2], (L, H, KD)),
        'wv': nrm(keys[3], (L, H, VD)), 'wo': nrm(keys[4], (L, VD, H)),
        'ln2g': jnp.ones((L, H), jnp.float32), 'ln2b': jnp.zeros((L, H), jnp.float32),
        'c1w': nrm(keys[5], (L, 3, H, F)), 'c1b': nrm(keys[6], (L, F)),
        'c2w': nrm(keys[7], (L, 3, F, H)), 'c2b': nrm(keys[8], (L, H)),
        'lnfg': jnp.ones((1, H), jnp.float32), 'lnfb': jnp.zeros((1, H), jnp.float32),
    }


def ref_forward(inputs, mask, p):
    def ln(v, g, b):
        mean = v.mean(-1, keepdims=True)
        var = ((v - mean) ** 2).sum(-1, keepdims=True) / (v.shape[-1] - 1)
        return g * (v - mean) / (jnp.sqrt(var) + EPS) + b

    def conv3(xin, w3, b):   # xin [B,S,Cin], w3 [3,Cin,Cout]
        xp = jnp.pad(xin, ((0, 0), (1, 1), (0, 0)))
        return (jnp.einsum('bsc,cd->bsd', xp[:, :-2], w3[0])
                + jnp.einsum('bsc,cd->bsd', xp[:, 1:-1], w3[1])
                + jnp.einsum('bsc,cd->bsd', xp[:, 2:], w3[2]) + b)

    h = jnp.einsum('bse,eh->bsh', inputs, p['wemb']) + p['timing'][None]
    for l in range(L):
        xn = ln(h, p['ln1g'][l], p['ln1b'][l])
        q = jnp.einsum('bsh,hk->bsk', xn, p['wq'][l]) * QUERY_SCALE
        k = jnp.einsum('bsh,hk->bsk', xn, p['wk'][l])
        v = jnp.einsum('bsh,hk->bsk', xn, p['wv'][l])
        ctxs = []
        for hd in range(NH):
            qs, ks = q[..., hd * DK:(hd + 1) * DK], k[..., hd * DK:(hd + 1) * DK]
            vs = v[..., hd * DV:(hd + 1) * DV]
            logits = jnp.einsum('bqd,bkd->bqk', qs, ks)
            logits = jnp.where(mask > 0, NEG_INF, logits)   # mask [B,1,S] broadcasts over queries
            w = jax.nn.softmax(logits, axis=-1)
            ctxs.append(jnp.einsum('bqk,bkd->bqd', w, vs))
        h = h + jnp.einsum('bsv,vh->bsh', jnp.concatenate(ctxs, -1), p['wo'][l])
        xn2 = ln(h, p['ln2g'][l], p['ln2b'][l])
        f = jax.nn.relu(conv3(xn2, p['c1w'][l], p['c1b'][l]))
        f = jax.nn.relu(conv3(f, p['c2w'][l], p['c2b'][l]))
        h = h + f
    return ln(h, p['lnfg'][0], p['lnfb'][0])


# ------------------------------------- main ----------------------------------------
if __name__ == "__main__":
    key = jax.random.PRNGKey(0)
    kx, kp = jax.random.split(key)
    x = jax.random.normal(kx, (B, S, E), dtype=jnp.float32)
    lengths = jnp.array([S, 5])
    pos = jnp.arange(S)[None, :]
    mask = (pos >= lengths[:, None]).astype(jnp.float32)[:, None, :]   # [B,1,S], 1.0 = PAD
    params = init_params(kp)
    packed = pack_params(params)    # one-time host-side packing (2 param buffers)

    fwd = jax.jit(emotion_encoder)
    out = fwd(x, mask, packed)
    out = jax.block_until_ready(out)

    ref = ref_forward(x, mask, params)
    # Tolerance sized for the EUP approximate reciprocal used only in the softmax
    # denominator (worst-case ~1e-3 absolute after two layers); everything else is f32.
    np.testing.assert_allclose(np.asarray(out), np.asarray(ref), rtol=2e-3, atol=2e-3)
    print("KERNEL_OK")
</pallas_src>

<mosaic_0001>
module attributes {stable_mosaic.version = 11 : i64} {
  func.func @emotion_encoder_kernel(%arg0: memref<16x48xf32, #tpu.memory_space<vmem>>, %arg1: memref<280x128xf32, #tpu.memory_space<vmem>>, %arg2: memref<496x32xf32, #tpu.memory_space<vmem>>, %arg3: memref<16x32xf32, #tpu.memory_space<vmem>>) attributes {dimension_semantics = [], scalar_prefetch = 0 : i64, scratch_operands = 0 : i64, tpu.core_type = #tpu.core_type<tc>} {
    %c0 = arith.constant 0 : index
    %c0_0 = arith.constant 0 : index
    %0 = vector.load %arg0[%c0, %c0_0] : memref<16x48xf32, #tpu.memory_space<vmem>>, vector<16x32xf32>
    %c0_1 = arith.constant 0 : index
    %c32 = arith.constant 32 : index
    %1 = vector.load %arg0[%c0_1, %c32] : memref<16x48xf32, #tpu.memory_space<vmem>>, vector<16x16xf32>
    %c0_2 = arith.constant 0 : index
    %c0_3 = arith.constant 0 : index
    %2 = vector.load %arg2[%c0_2, %c0_3] : memref<496x32xf32, #tpu.memory_space<vmem>>, vector<32x32xf32>
    %cst = arith.constant dense<0.000000e+00> : vector<16x32xf32>
    %3 = tpu.matmul %0, %2, %cst {dimension_numbers = #tpu.dot_dimension_numbers<[1], [0], [0], [1], [0, 0, 1, 1], [], []>} : vector<16x32xf32>, vector<32x32xf32>, vector<16x32xf32> -> vector<16x32xf32>
    %c32_4 = arith.constant 32 : index
    %c0_5 = arith.constant 0 : index
    %4 = vector.load %arg2[%c32_4, %c0_5] : memref<496x32xf32, #tpu.memory_space<vmem>>, vector<16x32xf32>
    %5 = arith.addf %3, %4 : vector<16x32xf32>
    %6 = tpu.iota {dimensions = array<i32: 0>} : vector<16x1xi32>
    %c8_i32 = arith.constant 8 : i32
    %c0_i32 = arith.constant 0 : i32
    %7 = arith.cmpi eq, %c8_i32, %c0_i32 : i32
    %c1_i32 = arith.constant 1 : i32
    %8 = arith.select %7, %c1_i32, %c8_i32 : i32
    %9 = vector.broadcast %8 : i32 to vector<16x1xi32>
    %10 = arith.remsi %6, %9 : vector<16x1xi32>
    %c0_i32_6 = arith.constant 0 : i32
    %11 = vector.broadcast %c0_i32_6 : i32 to vector<16x1xi32>
    %12 = arith.cmpi ne, %10, %11 : vector<16x1xi32>
    %c0_i32_7 = arith.constant 0 : i32
    %13 = vector.broadcast %c0_i32_7 : i32 to vector<16x1xi32>
    %14 = arith.cmpi slt, %10, %13 : vector<16x1xi32>
    %c0_i32_8 = arith.constant 0 : i32
    %15 = arith.cmpi slt, %8, %c0_i32_8 : i32
    %16 = vector.broadcast %15 : i1 to vector<16x1xi1>
    %17 = vector.broadcast %16 : vector<16x1xi1> to vector<16x1xi1>
    %18 = arith.xori %14, %17 : vector<16x1xi1>
    %19 = arith.andi %18, %12 : vector<16x1xi1>
    %20 = vector.broadcast %8 : i32 to vector<16x1xi32>
    %21 = arith.addi %10, %20 : vector<16x1xi32>
    %22 = arith.select %19, %21, %10 : vector<16x1xi1>, vector<16x1xi32>
    %c0_i32_9 = arith.constant 0 : i32
    %23 = vector.broadcast %c0_i32_9 : i32 to vector<16x1xi32>
    %24 = arith.cmpi ne, %22, %23 : vector<16x1xi32>
    %c8_i32_10 = arith.constant 8 : i32
    %c0_i32_11 = arith.constant 0 : i32
    %25 = arith.cmpi eq, %c8_i32_10, %c0_i32_11 : i32
    %c1_i32_12 = arith.constant 1 : i32
    %26 = arith.select %25, %c1_i32_12, %c8_i32_10 : i32
    %27 = vector.broadcast %26 : i32 to vector<16x1xi32>
    %28 = arith.remsi %6, %27 : vector<16x1xi32>
    %c0_i32_13 = arith.constant 0 : i32
    %29 = vector.broadcast %c0_i32_13 : i32 to vector<16x1xi32>
    %30 = arith.cmpi ne, %28, %29 : vector<16x1xi32>
    %c0_i32_14 = arith.constant 0 : i32
    %31 = vector.broadcast %c0_i32_14 : i32 to vector<16x1xi32>
    %32 = arith.cmpi slt, %28, %31 : vector<16x1xi32>
    %c0_i32_15 = arith.constant 0 : i32
    %33 = arith.cmpi slt, %26, %c0_i32_15 : i32
    %34 = vector.broadcast %33 : i1 to vector<16x1xi1>
    %35 = vector.broadcast %34 : vector<16x1xi1> to vector<16x1xi1>
    %36 = arith.xori %32, %35 : vector<16x1xi1>
    %37 = arith.andi %36, %30 : vector<16x1xi1>
    %38 = vector.broadcast %26 : i32 to vector<16x1xi32>
    %39 = arith.addi %28, %38 : vector<16x1xi32>
    %40 = arith.select %37, %39, %28 : vector<16x1xi1>, vector<16x1xi32>
    %c7_i32 = arith.constant 7 : i32
    %41 = vector.broadcast %c7_i32 : i32 to vector<16x1xi32>
    %42 = arith.cmpi ne, %40, %41 : vector<16x1xi32>
    %cst_16 = arith.constant dense<0.000000e+00> : vector<16xf32>
    %43 = vector.multi_reduction <add>, %5, %cst_16 [1] : vector<16x32xf32> to vector<16xf32>
    %44 = vector.shape_cast %43 : vector<16xf32> to vector<16x1xf32>
    %cst_17 = arith.constant 3.200000e+01 : f32
    %45 = vector.broadcast %cst_17 : f32 to vector<16x1xf32>
    %46 = arith.divf %44, %45 : vector<16x1xf32>
    %47 = vector.broadcast %46 : vector<16x1xf32> to vector<16x32xf32>
    %48 = arith.subf %5, %47 : vector<16x32xf32>
    %49 = arith.mulf %48, %48 : vector<16x32xf32>
    %cst_18 = arith.constant dense<0.000000e+00> : vector<16xf32>
    %50 = vector.multi_reduction <add>, %49, %cst_18 [1] : vector<16x32xf32> to vector<16xf32>
    %51 = vector.shape_cast %50 : vector<16xf32> to vector<16x1xf32>
    %cst_19 = arith.constant 3.100000e+01 : f32
    %52 = vector.broadcast %cst_19 : f32 to vector<16x1xf32>
    %53 = arith.divf %51, %52 : vector<16x1xf32>
    %54 = vector.broadcast %46 : vector<16x1xf32> to vector<16x32xf32>
    %55 = arith.subf %5, %54 : vector<16x32xf32>
    %56 = math.sqrt %53 : vector<16x1xf32>
    %cst_20 = arith.constant 9.99999997E-7 : f32
    %57 = vector.broadcast %cst_20 : f32 to vector<16x1xf32>
    %58 = arith.addf %56, %57 : vector<16x1xf32>
    %59 = tpu.reciprocal %58 : vector<16x1xf32> -> vector<16x1xf32>
    %60 = vector.broadcast %59 : vector<16x1xf32> to vector<16x32xf32>
    %61 = arith.mulf %55, %60 : vector<16x32xf32>
    %c0_21 = arith.constant 0 : index
    %c0_22 = arith.constant 0 : index
    %62 = vector.load %arg1[%c0_21, %c0_22] : memref<280x128xf32, #tpu.memory_space<vmem>>, vector<32x96xf32>
    %cst_23 = arith.constant dense<0.000000e+00> : vector<16x96xf32>
    %63 = tpu.matmul %61, %62, %cst_23 {dimension_numbers = #tpu.dot_dimension_numbers<[1], [0], [0], [1], [0, 0, 1, 1], [], []>} : vector<16x32xf32>, vector<32x96xf32>, vector<16x96xf32> -> vector<16x96xf32>
    %c256 = arith.constant 256 : index
    %c0_24 = arith.constant 0 : index
    %64 = vector.load %arg1[%c256, %c0_24] : memref<280x128xf32, #tpu.memory_space<vmem>>, vector<1x96xf32>
    %65 = vector.broadcast %64 : vector<1x96xf32> to vector<16x96xf32>
    %66 = arith.addf %63, %65 : vector<16x96xf32>
    %67 = vector.extract_strided_slice %66 {offsets = [0, 0], sizes = [16, 16], strides = [1, 1]} : vector<16x96xf32> to vector<16x16xf32>
    %68 = vector.extract_strided_slice %66 {offsets = [0, 32], sizes = [16, 16], strides = [1, 1]} : vector<16x96xf32> to vector<16x16xf32>
    %69 = vector.extract_strided_slice %66 {offsets = [0, 64], sizes = [16, 16], strides = [1, 1]} : vector<16x96xf32> to vector<16x16xf32>
    %cst_25 = arith.constant dense<0.000000e+00> : vector<16x16xf32>
    %70 = tpu.matmul %67, %68, %cst_25 {dimension_numbers = #tpu.dot_dimension_numbers<[1], [1], [0], [0], [0, 0, 1, 0], [], []>} : vector<16x16xf32>, vector<16x16xf32>, vector<16x16xf32> -> vector<16x16xf32>
    %71 = arith.addf %70, %1 : vector<16x16xf32>
    %cst_26 = arith.constant dense<0xFF800000> : vector<16xf32>
    %72 = vector.multi_reduction <maximumf>, %71, %cst_26 [1] : vector<16x16xf32> to vector<16xf32>
    %73 = vector.shape_cast %72 : vector<16xf32> to vector<16x1xf32>
    %74 = vector.broadcast %73 : vector<16x1xf32> to vector<16x16xf32>
    %75 = arith.subf %71, %74 : vector<16x16xf32>
    %76 = math.exp %75 : vector<16x16xf32>
    %cst_27 = arith.constant dense<0.000000e+00> : vector<16xf32>
    %77 = vector.multi_reduction <add>, %76, %cst_27 [1] : vector<16x16xf32> to vector<16xf32>
    %78 = vector.shape_cast %77 : vector<16xf32> to vector<16x1xf32>
    %79 = tpu.reciprocal %78 {approx = true} : vector<16x1xf32> -> vector<16x1xf32>
    %80 = vector.broadcast %79 : vector<16x1xf32> to vector<16x16xf32>
    %81 = arith.mulf %76, %80 : vector<16x16xf32>
    %cst_28 = arith.constant dense<0.000000e+00> : vector<16x16xf32>
    %82 = tpu.matmul %81, %69, %cst_28 {dimension_numbers = #tpu.dot_dimension_numbers<[1], [0], [0], [1], [0, 0, 1, 1], [], []>} : vector<16x16xf32>, vector<16x16xf32>, vector<16x16xf32> -> vector<16x16xf32>
    %83 = vector.extract_strided_slice %66 {offsets = [0, 16], sizes = [16, 16], strides = [1, 1]} : vector<16x96xf32> to vector<16x16xf32>
    %84 = vector.extract_strided_slice %66 {offsets = [0, 48], sizes = [16, 16], strides = [1, 1]} : vector<16x96xf32> to vector<16x16xf32>
    %85 = vector.extract_strided_slice %66 {offsets = [0, 80], sizes = [16, 16], strides = [1, 1]} : vector<16x96xf32> to vector<16x16xf32>
    %cst_29 = arith.constant dense<0.000000e+00> : vector<16x16xf32>
    %86 = tpu.matmul %83, %84, %cst_29 {dimension_numbers = #tpu.dot_dimension_numbers<[1], [1], [0], [0], [0, 0, 1, 0], [], []>} : vector<16x16xf32>, vector<16x16xf32>, vector<16x16xf32> -> vector<16x16xf32>
    %87 = arith.addf %86, %1 : vector<16x16xf32>
    %cst_30 = arith.constant dense<0xFF800000> : vector<16xf32>
    %88 = vector.multi_reduction <maximumf>, %87, %cst_30 [1] : vector<16x16xf32> to vector<16xf32>
    %89 = vector.shape_cast %88 : vector<16xf32> to vector<16x1xf32>
    %90 = vector.broadcast %89 : vector<16x1xf32> to vector<16x16xf32>
    %91 = arith.subf %87, %90 : vector<16x16xf32>
    %92 = math.exp %91 : vector<16x16xf32>
    %cst_31 = arith.constant dense<0.000000e+00> : vector<16xf32>
    %93 = vector.multi_reduction <add>, %92, %cst_31 [1] : vector<16x16xf32> to vector<16xf32>
    %94 = vector.shape_cast %93 : vector<16xf32> to vector<16x1xf32>
    %95 = tpu.reciprocal %94 {approx = true} : vector<16x1xf32> -> vector<16x1xf32>
    %96 = vector.broadcast %95 : vector<16x1xf32> to vector<16x16xf32>
    %97 = arith.mulf %92, %96 : vector<16x16xf32>
    %cst_32 = arith.constant dense<0.000000e+00> : vector<16x16xf32>
    %98 = tpu.matmul %97, %85, %cst_32 {dimension_numbers = #tpu.dot_dimension_numbers<[1], [0], [0], [1], [0, 0, 1, 1], [], []>} : vector<16x16xf32>, vector<16x16xf32>, vector<16x16xf32> -> vector<16x16xf32>
    %99 = tpu.concatenate %82, %98 in 1 : vector<16x16xf32>, vector<16x16xf32> -> vector<16x32xf32>
    %c48 = arith.constant 48 : index
    %c0_33 = arith.constant 0 : index
    %100 = vector.load %arg2[%c48, %c0_33] : memref<496x32xf32, #tpu.memory_space<vmem>>, vector<32x32xf32>
    %cst_34 = arith.constant dense<0.000000e+00> : vector<16x32xf32>
    %101 = tpu.matmul %99, %100, %cst_34 {dimension_numbers = #tpu.dot_dimension_numbers<[1], [0], [0], [1], [0, 0, 1, 1], [], []>} : vector<16x32xf32>, vector<32x32xf32>, vector<16x32xf32> -> vector<16x32xf32>
    %102 = arith.addf %5, %101 : vector<16x32xf32>
    %c257 = arith.constant 257 : index
    %c0_35 = arith.constant 0 : index
    %103 = vector.load %arg1[%c257, %c0_35] : memref<280x128xf32, #tpu.memory_space<vmem>>, vector<1x32xf32>
    %cst_36 = arith.constant dense<0.000000e+00> : vector<16xf32>
    %104 = vector.multi_reduction <add>, %102, %cst_36 [1] : vector<16x32xf32> to vector<16xf32>
    %105 = vector.shape_cast %104 : vector<16xf32> to vector<16x1xf32>
    %cst_37 = arith.constant 3.200000e+01 : f32
    %106 = vector.broadcast %cst_37 : f32 to vector<16x1xf32>
    %107 = arith.divf %105, %106 : vector<16x1xf32>
    %108 = vector.broadcast %107 : vector<16x1xf32> to vector<16x32xf32>
    %109 = arith.subf %102, %108 : vector<16x32xf32>
    %110 = arith.mulf %109, %109 : vector<16x32xf32>
    %cst_38 = arith.constant dense<0.000000e+00> : vector<16xf32>
    %111 = vector.multi_reduction <add>, %110, %cst_38 [1] : vector<16x32xf32> to vector<16xf32>
    %112 = vector.shape_cast %111 : vector<16xf32> to vector<16x1xf32>
    %cst_39 = arith.constant 3.100000e+01 : f32
    %113 = vector.broadcast %cst_39 : f32 to vector<16x1xf32>
    %114 = arith.divf %112, %113 : vector<16x1xf32>
    %115 = vector.broadcast %107 : vector<16x1xf32> to vector<16x32xf32>
    %116 = arith.subf %102, %115 : vector<16x32xf32>
    %117 = math.sqrt %114 : vector<16x1xf32>
    %cst_40 = arith.constant 9.99999997E-7 : f32
    %118 = vector.broadcast %cst_40 : f32 to vector<16x1xf32>
    %119 = arith.addf %117, %118 : vector<16x1xf32>
    %120 = tpu.reciprocal %119 : vector<16x1xf32> -> vector<16x1xf32>
    %121 = vector.broadcast %120 : vector<16x1xf32> to vector<16x32xf32>
    %122 = arith.mulf %116, %121 : vector<16x32xf32>
    %123 = vector.broadcast %103 : vector<1x32xf32> to vector<16x32xf32>
    %124 = arith.mulf %123, %122 : vector<16x32xf32>
    %c258 = arith.constant 258 : index
    %c0_41 = arith.constant 0 : index
    %125 = vector.load %arg1[%c258, %c0_41] : memref<280x128xf32, #tpu.memory_space<vmem>>, vector<1x32xf32>
    %126 = vector.broadcast %125 : vector<1x32xf32> to vector<16x32xf32>
    %127 = arith.addf %124, %126 : vector<16x32xf32>
    %c1_i32_42 = arith.constant 1 : i32
    %128 = tpu.dynamic_rotate %127 by %c1_i32_42 dim 0 : vector<16x32xf32>, i32 -> vector<16x32xf32>
    %cst_43 = arith.constant 0.000000e+00 : f32
    %129 = vector.shape_cast %24 : vector<16x1xi1> to vector<16x1xi1>
    %130 = vector.broadcast %129 : vector<16x1xi1> to vector<16x32xi1>
    %131 = vector.broadcast %cst_43 : f32 to vector<16x32xf32>
    %132 = arith.select %130, %128, %131 : vector<16x32xi1>, vector<16x32xf32>
    %c15_i32 = arith.constant 15 : i32
    %133 = tpu.dynamic_rotate %127 by %c15_i32 dim 0 : vector<16x32xf32>, i32 -> vector<16x32xf32>
    %cst_44 = arith.constant 0.000000e+00 : f32
    %134 = vector.shape_cast %42 : vector<16x1xi1> to vector<16x1xi1>
    %135 = vector.broadcast %134 : vector<16x1xi1> to vector<16x32xi1>
    %136 = vector.broadcast %cst_44 : f32 to vector<16x32xf32>
    %137 = arith.select %135, %133, %136 : vector<16x32xi1>, vector<16x32xf32>
    %138 = tpu.concatenate %132, %127, %137 in 1 : vector<16x32xf32>, vector<16x32xf32>, vector<16x32xf32> -> vector<16x96xf32>
    %c64 = arith.constant 64 : index
    %c0_45 = arith.constant 0 : index
    %139 = vector.load %arg1[%c64, %c0_45] : memref<280x128xf32, #tpu.memory_space<vmem>>, vector<96x64xf32>
    %cst_46 = arith.constant dense<0.000000e+00> : vector<16x64xf32>
    %140 = tpu.matmul %138, %139, %cst_46 {dimension_numbers = #tpu.dot_dimension_numbers<[1], [0], [0], [1], [0, 0, 1, 1], [], []>} : vector<16x96xf32>, vector<96x64xf32>, vector<16x64xf32> -> vector<16x64xf32>
    %c259 = arith.constant 259 : index
    %c0_47 = arith.constant 0 : index
    %141 = vector.load %arg1[%c259, %c0_47] : memref<280x128xf32, #tpu.memory_space<vmem>>, vector<1x64xf32>
    %142 = vector.broadcast %141 : vector<1x64xf32> to vector<16x64xf32>
    %143 = arith.addf %140, %142 : vector<16x64xf32>
    %cst_48 = arith.constant 0.000000e+00 : f32
    %144 = vector.broadcast %cst_48 : f32 to vector<16x64xf32>
    %145 = arith.maximumf %143, %144 : vector<16x64xf32>
    %c1_i32_49 = arith.constant 1 : i32
    %146 = tpu.dynamic_rotate %145 by %c1_i32_49 dim 0 : vector<16x64xf32>, i32 -> vector<16x64xf32>
    %cst_50 = arith.constant 0.000000e+00 : f32
    %147 = vector.shape_cast %24 : vector<16x1xi1> to vector<16x1xi1>
    %148 = vector.broadcast %147 : vector<16x1xi1> to vector<16x64xi1>
    %149 = vector.broadcast %cst_50 : f32 to vector<16x64xf32>
    %150 = arith.select %148, %146, %149 : vector<16x64xi1>, vector<16x64xf32>
    %c15_i32_51 = arith.constant 15 : i32
    %151 = tpu.dynamic_rotate %145 by %c15_i32_51 dim 0 : vector<16x64xf32>, i32 -> vector<16x64xf32>
    %cst_52 = arith.constant 0.000000e+00 : f32
    %152 = vector.shape_cast %42 : vector<16x1xi1> to vector<16x1xi1>
    %153 = vector.broadcast %152 : vector<16x1xi1> to vector<16x64xi1>
    %154 = vector.broadcast %cst_52 : f32 to vector<16x64xf32>
    %155 = arith.select %153, %151, %154 : vector<16x64xi1>, vector<16x64xf32>
    %156 = tpu.concatenate %150, %145, %155 in 1 : vector<16x64xf32>, vector<16x64xf32>, vector<16x64xf32> -> vector<16x192xf32>
    %c112 = arith.constant 112 : index
    %c0_53 = arith.constant 0 : index
    %157 = vector.load %arg2[%c112, %c0_53] : memref<496x32xf32, #tpu.memory_space<vmem>>, vector<192x32xf32>
    %cst_54 = arith.constant dense<0.000000e+00> : vector<16x32xf32>
    %158 = tpu.matmul %156, %157, %cst_54 {dimension_numbers = #tpu.dot_dimension_numbers<[1], [0], [0], [1], [0, 0, 1, 1], [], []>} : vector<16x192xf32>, vector<192x32xf32>, vector<16x32xf32> -> vector<16x32xf32>
    %c260 = arith.constant 260 : index
    %c0_55 = arith.constant 0 : index
    %159 = vector.load %arg1[%c260, %c0_55] : memref<280x128xf32, #tpu.memory_space<vmem>>, vector<1x32xf32>
    %160 = vector.broadcast %159 : vector<1x32xf32> to vector<16x32xf32>
    %161 = arith.addf %158, %160 : vector<16x32xf32>
    %cst_56 = arith.constant 0.000000e+00 : f32
    %162 = vector.broadcast %cst_56 : f32 to vector<16x32xf32>
    %163 = arith.maximumf %161, %162 : vector<16x32xf32>
    %164 = arith.addf %102, %163 : vector<16x32xf32>
    %cst_57 = arith.constant dense<0.000000e+00> : vector<16xf32>
    %165 = vector.multi_reduction <add>, %164, %cst_57 [1] : vector<16x32xf32> to vector<16xf32>
    %166 = vector.shape_cast %165 : vector<16xf32> to vector<16x1xf32>
    %cst_58 = arith.constant 3.200000e+01 : f32
    %167 = vector.broadcast %cst_58 : f32 to vector<16x1xf32>
    %168 = arith.divf %166, %167 : vector<16x1xf32>
    %169 = vector.broadcast %168 : vector<16x1xf32> to vector<16x32xf32>
    %170 = arith.subf %164, %169 : vector<16x32xf32>
    %171 = arith.mulf %170, %170 : vector<16x32xf32>
    %cst_59 = arith.constant dense<0.000000e+00> : vector<16xf32>
    %172 = vector.multi_reduction <add>, %171, %cst_59 [1] : vector<16x32xf32> to vector<16xf32>
    %173 = vector.shape_cast %172 : vector<16xf32> to vector<16x1xf32>
    %cst_60 = arith.constant 3.100000e+01 : f32
    %174 = vector.broadcast %cst_60 : f32 to vector<16x1xf32>
    %175 = arith.divf %173, %174 : vector<16x1xf32>
    %176 = vector.broadcast %168 : vector<16x1xf32> to vector<16x32xf32>
    %177 = arith.subf %164, %176 : vector<16x32xf32>
    %178 = math.sqrt %175 : vector<16x1xf32>
    %cst_61 = arith.constant 9.99999997E-7 : f32
    %179 = vector.broadcast %cst_61 : f32 to vector<16x1xf32>
    %180 = arith.addf %178, %179 : vector<16x1xf32>
    %181 = tpu.reciprocal %180 : vector<16x1xf32> -> vector<16x1xf32>
    %182 = vector.broadcast %181 : vector<16x1xf32> to vector<16x32xf32>
    %183 = arith.mulf %177, %182 : vector<16x32xf32>
    %c32_62 = arith.constant 32 : index
    %c0_63 = arith.constant 0 : index
    %184 = vector.load %arg1[%c32_62, %c0_63] : memref<280x128xf32, #tpu.memory_space<vmem>>, vector<32x96xf32>
    %cst_64 = arith.constant dense<0.000000e+00> : vector<16x96xf32>
    %185 = tpu.matmul %183, %184, %cst_64 {dimension_numbers = #tpu.dot_dimension_numbers<[1], [0], [0], [1], [0, 0, 1, 1], [], []>} : vector<16x32xf32>, vector<32x96xf32>, vector<16x96xf32> -> vector<16x96xf32>
    %c264 = arith.constant 264 : index
    %c0_65 = arith.constant 0 : index
    %186 = vector.load %arg1[%c264, %c0_65] : memref<280x128xf32, #tpu.memory_space<vmem>>, vector<1x96xf32>
    %187 = vector.broadcast %186 : vector<1x96xf32> to vector<16x96xf32>
    %188 = arith.addf %185, %187 : vector<16x96xf32>
    %189 = vector.extract_strided_slice %188 {offsets = [0, 0], sizes = [16, 16], strides = [1, 1]} : vector<16x96xf32> to vector<16x16xf32>
    %190 = vector.extract_strided_slice %188 {offsets = [0, 32], sizes = [16, 16], strides = [1, 1]} : vector<16x96xf32> to vector<16x16xf32>
    %191 = vector.extract_strided_slice %188 {offsets = [0, 64], sizes = [16, 16], strides = [1, 1]} : vector<16x96xf32> to vector<16x16xf32>
    %cst_66 = arith.constant dense<0.000000e+00> : vector<16x16xf32>
    %192 = tpu.matmul %189, %190, %cst_66 {dimension_numbers = #tpu.dot_dimension_numbers<[1], [1], [0], [0], [0, 0, 1, 0], [], []>} : vector<16x16xf32>, vector<16x16xf32>, vector<16x16xf32> -> vector<16x16xf32>
    %193 = arith.addf %192, %1 : vector<16x16xf32>
    %cst_67 = arith.constant dense<0xFF800000> : vector<16xf32>
    %194 = vector.multi_reduction <maximumf>, %193, %cst_67 [1] : vector<16x16xf32> to vector<16xf32>
    %195 = vector.shape_cast %194 : vector<16xf32> to vector<16x1xf32>
    %196 = vector.broadcast %195 : vector<16x1xf32> to vector<16x16xf32>
    %197 = arith.subf %193, %196 : vector<16x16xf32>
    %198 = math.exp %197 : vector<16x16xf32>
    %cst_68 = arith.constant dense<0.000000e+00> : vector<16xf32>
    %199 = vector.multi_reduction <add>, %198, %cst_68 [1] : vector<16x16xf32> to vector<16xf32>
    %200 = vector.shape_cast %199 : vector<16xf32> to vector<16x1xf32>
    %201 = tpu.reciprocal %200 {approx = true} : vector<16x1xf32> -> vector<16x1xf32>
    %202 = vector.broadcast %201 : vector<16x1xf32> to vector<16x16xf32>
    %203 = arith.mulf %198, %202 : vector<16x16xf32>
    %cst_69 = arith.constant dense<0.000000e+00> : vector<16x16xf32>
    %204 = tpu.matmul %203, %191, %cst_69 {dimension_numbers = #tpu.dot_dimension_numbers<[1], [0], [0], [1], [0, 0, 1, 1], [], []>} : vector<16x16xf32>, vector<16x16xf32>, vector<16x16xf32> -> vector<16x16xf32>
    %205 = vector.extract_strided_slice %188 {offsets = [0, 16], sizes = [16, 16], strides = [1, 1]} : vector<16x96xf32> to vector<16x16xf32>
    %206 = vector.extract_strided_slice %188 {offsets = [0, 48], sizes = [16, 16], strides = [1, 1]} : vector<16x96xf32> to vector<16x16xf32>
    %207 = vector.extract_strided_slice %188 {offsets = [0, 80], sizes = [16, 16], strides = [1, 1]} : vector<16x96xf32> to vector<16x16xf32>
    %cst_70 = arith.constant dense<0.000000e+00> : vector<16x16xf32>
    %208 = tpu.matmul %205, %206, %cst_70 {dimension_numbers = #tpu.dot_dimension_numbers<[1], [1], [0], [0], [0, 0, 1, 0], [], []>} : vector<16x16xf32>, vector<16x16xf32>, vector<16x16xf32> -> vector<16x16xf32>
    %209 = arith.addf %208, %1 : vector<16x16xf32>
    %cst_71 = arith.constant dense<0xFF800000> : vector<16xf32>
    %210 = vector.multi_reduction <maximumf>, %209, %cst_71 [1] : vector<16x16xf32> to vector<16xf32>
    %211 = vector.shape_cast %210 : vector<16xf32> to vector<16x1xf32>
    %212 = vector.broadcast %211 : vector<16x1xf32> to vector<16x16xf32>
    %213 = arith.subf %209, %212 : vector<16x16xf32>
    %214 = math.exp %213 : vector<16x16xf32>
    %cst_72 = arith.constant dense<0.000000e+00> : vector<16xf32>
    %215 = vector.multi_reduction <add>, %214, %cst_72 [1] : vector<16x16xf32> to vector<16xf32>
    %216 = vector.shape_cast %215 : vector<16xf32> to vector<16x1xf32>
    %217 = tpu.reciprocal %216 {approx = true} : vector<16x1xf32> -> vector<16x1xf32>
    %218 = vector.broadcast %217 : vector<16x1xf32> to vector<16x16xf32>
    %219 = arith.mulf %214, %218 : vector<16x16xf32>
    %cst_73 = arith.constant dense<0.000000e+00> : vector<16x16xf32>
    %220 = tpu.matmul %219, %207, %cst_73 {dimension_numbers = #tpu.dot_dimension_numbers<[1], [0], [0], [1], [0, 0, 1, 1], [], []>} : vector<16x16xf32>, vector<16x16xf32>, vector<16x16xf32> -> vector<16x16xf32>
    %221 = tpu.concatenate %204, %220 in 1 : vector<16x16xf32>, vector<16x16xf32> -> vector<16x32xf32>
    %c80 = arith.constant 80 : index
    %c0_74 = arith.constant 0 : index
    %222 = vector.load %arg2[%c80, %c0_74] : memref<496x32xf32, #tpu.memory_space<vmem>>, vector<32x32xf32>
    %cst_75 = arith.constant dense<0.000000e+00> : vector<16x32xf32>
    %223 = tpu.matmul %221, %222, %cst_75 {dimension_numbers = #tpu.dot_dimension_numbers<[1], [0], [0], [1], [0, 0, 1, 1], [], []>} : vector<16x32xf32>, vector<32x32xf32>, vector<16x32xf32> -> vector<16x32xf32>
    %224 = arith.addf %164, %223 : vector<16x32xf32>
    %c265 = arith.constant 265 : index
    %c0_76 = arith.constant 0 : index
    %225 = vector.load %arg1[%c265, %c0_76] : memref<280x128xf32, #tpu.memory_space<vmem>>, vector<1x32xf32>
    %cst_77 = arith.constant dense<0.000000e+00> : vector<16xf32>
    %226 = vector.multi_reduction <add>, %224, %cst_77 [1] : vector<16x32xf32> to vector<16xf32>
    %227 = vector.shape_cast %226 : vector<16xf32> to vector<16x1xf32>
    %cst_78 = arith.constant 3.200000e+01 : f32
    %228 = vector.broadcast %cst_78 : f32 to vector<16x1xf32>
    %229 = arith.divf %227, %228 : vector<16x1xf32>
    %230 = vector.broadcast %229 : vector<16x1xf32> to vector<16x32xf32>
    %231 = arith.subf %224, %230 : vector<16x32xf32>
    %232 = arith.mulf %231, %231 : vector<16x32xf32>
    %cst_79 = arith.constant dense<0.000000e+00> : vector<16xf32>
    %233 = vector.multi_reduction <add>, %232, %cst_79 [1] : vector<16x32xf32> to vector<16xf32>
    %234 = vector.shape_cast %233 : vector<16xf32> to vector<16x1xf32>
    %cst_80 = arith.constant 3.100000e+01 : f32
    %235 = vector.broadcast %cst_80 : f32 to vector<16x1xf32>
    %236 = arith.divf %234, %235 : vector<16x1xf32>
    %237 = vector.broadcast %229 : vector<16x1xf32> to vector<16x32xf32>
    %238 = arith.subf %224, %237 : vector<16x32xf32>
    %239 = math.sqrt %236 : vector<16x1xf32>
    %cst_81 = arith.constant 9.99999997E-7 : f32
    %240 = vector.broadcast %cst_81 : f32 to vector<16x1xf32>
    %241 = arith.addf %239, %240 : vector<16x1xf32>
    %242 = tpu.reciprocal %241 : vector<16x1xf32> -> vector<16x1xf32>
    %243 = vector.broadcast %242 : vector<16x1xf32> to vector<16x32xf32>
    %244 = arith.mulf %238, %243 : vector<16x32xf32>
    %245 = vector.broadcast %225 : vector<1x32xf32> to vector<16x32xf32>
    %246 = arith.mulf %245, %244 : vector<16x32xf32>
    %c266 = arith.constant 266 : index
    %c0_82 = arith.constant 0 : index
    %247 = vector.load %arg1[%c266, %c0_82] : memref<280x128xf32, #tpu.memory_space<vmem>>, vector<1x32xf32>
    %248 = vector.broadcast %247 : vector<1x32xf32> to vector<16x32xf32>
    %249 = arith.addf %246, %248 : vector<16x32xf32>
    %c1_i32_83 = arith.constant 1 : i32
    %250 = tpu.dynamic_rotate %249 by %c1_i32_83 dim 0 : vector<16x32xf32>, i32 -> vector<16x32xf32>
    %cst_84 = arith.constant 0.000000e+00 : f32
    %251 = vector.shape_cast %24 : vector<16x1xi1> to vector<16x1xi1>
    %252 = vector.broadcast %251 : vector<16x1xi1> to vector<16x32xi1>
    %253 = vector.broadcast %cst_84 : f32 to vector<16x32xf32>
    %254 = arith.select %252, %250, %253 : vector<16x32xi1>, vector<16x32xf32>
    %c15_i32_85 = arith.constant 15 : i32
    %255 = tpu.dynamic_rotate %249 by %c15_i32_85 dim 0 : vector<16x32xf32>, i32 -> vector<16x32xf32>
    %cst_86 = arith.constant 0.000000e+00 : f32
    %256 = vector.shape_cast %42 : vector<16x1xi1> to vector<16x1xi1>
    %257 = vector.broadcast %256 : vector<16x1xi1> to vector<16x32xi1>
    %258 = vector.broadcast %cst_86 : f32 to vector<16x32xf32>
    %259 = arith.select %257, %255, %258 : vector<16x32xi1>, vector<16x32xf32>
    %260 = tpu.concatenate %254, %249, %259 in 1 : vector<16x32xf32>, vector<16x32xf32>, vector<16x32xf32> -> vector<16x96xf32>
    %c160 = arith.constant 160 : index
    %c0_87 = arith.constant 0 : index
    %261 = vector.load %arg1[%c160, %c0_87] : memref<280x128xf32, #tpu.memory_space<vmem>>, vector<96x64xf32>
    %cst_88 = arith.constant dense<0.000000e+00> : vector<16x64xf32>
    %262 = tpu.matmul %260, %261, %cst_88 {dimension_numbers = #tpu.dot_dimension_numbers<[1], [0], [0], [1], [0, 0, 1, 1], [], []>} : vector<16x96xf32>, vector<96x64xf32>, vector<16x64xf32> -> vector<16x64xf32>
    %c267 = arith.constant 267 : index
    %c0_89 = arith.constant 0 : index
    %263 = vector.load %arg1[%c267, %c0_89] : memref<280x128xf32, #tpu.memory_space<vmem>>, vector<1x64xf32>
    %264 = vector.broadcast %263 : vector<1x64xf32> to vector<16x64xf32>
    %265 = arith.addf %262, %264 : vector<16x64xf32>
    %cst_90 = arith.constant 0.000000e+00 : f32
    %266 = vector.broadcast %cst_90 : f32 to vector<16x64xf32>
    %267 = arith.maximumf %265, %266 : vector<16x64xf32>
    %c1_i32_91 = arith.constant 1 : i32
    %268 = tpu.dynamic_rotate %267 by %c1_i32_91 dim 0 : vector<16x64xf32>, i32 -> vector<16x64xf32>
    %cst_92 = arith.constant 0.000000e+00 : f32
    %269 = vector.shape_cast %24 : vector<16x1xi1> to vector<16x1xi1>
    %270 = vector.broadcast %269 : vector<16x1xi1> to vector<16x64xi1>
    %271 = vector.broadcast %cst_92 : f32 to vector<16x64xf32>
    %272 = arith.select %270, %268, %271 : vector<16x64xi1>, vector<16x64xf32>
    %c15_i32_93 = arith.constant 15 : i32
    %273 = tpu.dynamic_rotate %267 by %c15_i32_93 dim 0 : vector<16x64xf32>, i32 -> vector<16x64xf32>
    %cst_94 = arith.constant 0.000000e+00 : f32
    %274 = vector.shape_cast %42 : vector<16x1xi1> to vector<16x1xi1>
    %275 = vector.broadcast %274 : vector<16x1xi1> to vector<16x64xi1>
    %276 = vector.broadcast %cst_94 : f32 to vector<16x64xf32>
    %277 = arith.select %275, %273, %276 : vector<16x64xi1>, vector<16x64xf32>
    %278 = tpu.concatenate %272, %267, %277 in 1 : vector<16x64xf32>, vector<16x64xf32>, vector<16x64xf32> -> vector<16x192xf32>
    %c304 = arith.constant 304 : index
    %c0_95 = arith.constant 0 : index
    %279 = vector.load %arg2[%c304, %c0_95] : memref<496x32xf32, #tpu.memory_space<vmem>>, vector<192x32xf32>
    %cst_96 = arith.constant dense<0.000000e+00> : vector<16x32xf32>
    %280 = tpu.matmul %278, %279, %cst_96 {dimension_numbers = #tpu.dot_dimension_numbers<[1], [0], [0], [1], [0, 0, 1, 1], [], []>} : vector<16x192xf32>, vector<192x32xf32>, vector<16x32xf32> -> vector<16x32xf32>
    %c268 = arith.constant 268 : index
    %c0_97 = arith.constant 0 : index
    %281 = vector.load %arg1[%c268, %c0_97] : memref<280x128xf32, #tpu.memory_space<vmem>>, vector<1x32xf32>
    %282 = vector.broadcast %281 : vector<1x32xf32> to vector<16x32xf32>
    %283 = arith.addf %280, %282 : vector<16x32xf32>
    %cst_98 = arith.constant 0.000000e+00 : f32
    %284 = vector.broadcast %cst_98 : f32 to vector<16x32xf32>
    %285 = arith.maximumf %283, %284 : vector<16x32xf32>
    %286 = arith.addf %224, %285 : vector<16x32xf32>
    %c272 = arith.constant 272 : index
    %c0_99 = arith.constant 0 : index
    %287 = vector.load %arg1[%c272, %c0_99] : memref<280x128xf32, #tpu.memory_space<vmem>>, vector<1x32xf32>
    %cst_100 = arith.constant dense<0.000000e+00> : vector<16xf32>
    %288 = vector.multi_reduction <add>, %286, %cst_100 [1] : vector<16x32xf32> to vector<16xf32>
    %289 = vector.shape_cast %288 : vector<16xf32> to vector<16x1xf32>
    %cst_101 = arith.constant 3.200000e+01 : f32
    %290 = vector.broadcast %cst_101 : f32 to vector<16x1xf32>
    %291 = arith.divf %289, %290 : vector<16x1xf32>
    %292 = vector.broadcast %291 : vector<16x1xf32> to vector<16x32xf32>
    %293 = arith.subf %286, %292 : vector<16x32xf32>
    %294 = arith.mulf %293, %293 : vector<16x32xf32>
    %cst_102 = arith.constant dense<0.000000e+00> : vector<16xf32>
    %295 = vector.multi_reduction <add>, %294, %cst_102 [1] : vector<16x32xf32> to vector<16xf32>
    %296 = vector.shape_cast %295 : vector<16xf32> to vector<16x1xf32>
    %cst_103 = arith.constant 3.100000e+01 : f32
    %297 = vector.broadcast %cst_103 : f32 to vector<16x1xf32>
    %298 = arith.divf %296, %297 : vector<16x1xf32>
    %299 = vector.broadcast %291 : vector<16x1xf32> to vector<16x32xf32>
    %300 = arith.subf %286, %299 : vector<16x32xf32>
    %301 = math.sqrt %298 : vector<16x1xf32>
    %cst_104 = arith.constant 9.99999997E-7 : f32
    %302 = vector.broadcast %cst_104 : f32 to vector<16x1xf32>
    %303 = arith.addf %301, %302 : vector<16x1xf32>
    %304 = tpu.reciprocal %303 : vector<16x1xf32> -> vector<16x1xf32>
    %305 = vector.broadcast %304 : vector<16x1xf32> to vector<16x32xf32>
    %306 = arith.mulf %300, %305 : vector<16x32xf32>
    %307 = vector.broadcast %287 : vector<1x32xf32> to vector<16x32xf32>
    %308 = arith.mulf %307, %306 : vector<16x32xf32>
    %c273 = arith.constant 273 : index
    %c0_105 = arith.constant 0 : index
    %309 = vector.load %arg1[%c273, %c0_105] : memref<280x128xf32, #tpu.memory_space<vmem>>, vector<1x32xf32>
    %310 = vector.broadcast %309 : vector<1x32xf32> to vector<16x32xf32>
    %311 = arith.addf %308, %310 : vector<16x32xf32>
    %c0_106 = arith.constant 0 : index
    %c0_107 = arith.constant 0 : index
    %312 = vector.load %arg3[%c0_106, %c0_107] : memref<16x32xf32, #tpu.memory_space<vmem>>, vector<16x32xf32>
    tpu.vector_store %arg3[%c0_106, %c0_107], %311 {strides = array<i32>} : memref<16x32xf32, #tpu.memory_space<vmem>>, vector<16x32xf32>,
    return
  }
}

</mosaic_0001>

<llo_original>
// kernel: emotion_encoder.1
$region0: #{emotion_encoder.1}
  #allocation0 [shape = 'u32[]', space=smem, size = 0x4, offset = 0x4, fixed_abs, tag = 'smem constant byte address 0x4 - core index']
  #allocation1 [shape = 'u32[72,128]{1,0:T(1,128)}', space=vmem, size = 0x9000, scoped, tag = 'internal scratch']
  %s0 = inlined_call_operand.vmem [shape: f32[16,48], index: 0, kind: input, shape index: {}]
  %s1 = inlined_call_operand.vmem [shape: f32[280,128], index: 1, kind: input, shape index: {}]
  %s2 = inlined_call_operand.vmem [shape: f32[496,32], index: 2, kind: input, shape index: {}]
  %s3 = inlined_call_operand.hbm [shape: f32[16,32], index: 3, kind: output, shape index: {}]
  %s4 = sld [smem:[#allocation0]]
  $region22: #{emotion_encoder.1} parent=0
    _
  %s6 = ssub.s32 1, %s4
  %s7 = scalar_select 0, %s6, %s4
  $region1: #{emotion_encoder.1} parent=0
    #allocation2 [shape = 'u8[8192]{0}', space=vmem, size = 0x2000, scoped, tag = 'output window, operand 0, single buffered']
    #allocation3 [shape = 's32[1]{0}', space=sflag, size = 0x4, scoped, tag = 'scoped memory for emotion_encoder.1']
    %8 = vsyncpa [#allocation3], 0
    // Predicated region
    $region2: #{emotion_encoder.1} parent=1 // pred_check
      _
    $region3: #{emotion_encoder.1} parent=1 // pred_check_branch
      %10 = sbr.rel (0) target = $region5
    $region4: #{emotion_encoder.1} parent=1 // pred_region
      _
    $region5: #{emotion_encoder.1} parent=1 // pred_fallthru
      _
    // Predicated region
    $region6: #{emotion_encoder.1} parent=1 // pred_check
      _
    $region7: #{emotion_encoder.1} parent=1 // pred_check_branch
      %12 = sbr.rel (0) target = $region9
    $region8: #{emotion_encoder.1} parent=1 // pred_region
      _
    $region9: #{emotion_encoder.1} parent=1 // pred_fallthru
      _
    // Predicated region
    $region10: #{emotion_encoder.1} parent=1 // pred_check
      _
    $region11: #{emotion_encoder.1} parent=1 // pred_check_branch
      %14 = sbr.rel (0) target = $region13
    $region12: #{emotion_encoder.1} parent=1 // pred_region
      _
    $region13: #{emotion_encoder.1} parent=1 // pred_fallthru
      _
    %v15 = vld [vmem:[%s0] sm:$0xff]
    %v16 = vld [vmem:[%s0 + $0x8] sm:$0xff]
    %v17 = vld [vmem:[%s2] sm:$0xff]
    %v18 = vld [vmem:[%s2 + $0x8] sm:$0xff]
    %v19 = vld [vmem:[%s2 + $0x10] sm:$0xff]
    %v20 = vld [vmem:[%s2 + $0x18] sm:$0xff]
    %v21 = vld [vmem:[%s2 + $0x20] sm:$0xff]
    %v22 = vld [vmem:[%s2 + $0x28] sm:$0xff]
    %vm23 = vcmask 261120
    %v25 = vsel %vm23, %v15, 0
    %v28 = vsel %vm23, %v16, 0
    %30 = vmatpush.msra.mxu0 0.0
    %31 = vmatpush.msra.mxu0 0.0
    %32 = vmatpush.msra.mxu0 0.0
    %33 = vmatpush.msra.mxu0 0.0
    %34 = vmatpush.msra.mxu0 0.0
    %35 = vmatpush.msra.mxu0 0.0
    %36 = vmatpush.msra.mxu0 0.0
    %37 = vmatpush.msra.mxu0 0.0
    %38 = vmatpush.msra.mxu0 0.0
    %39 = vmatpush.msra.mxu0 0.0
    %40 = vmatpush.msra.mxu0 0.0
    %41 = vmatpush.msra.mxu0 0.0
    %42 = vmatpush.msra.mxu0 %v20
    %43 = vmatpush.msra.mxu0 %v19
    %44 = vmatpush.msra.mxu0 %v18
    %45 = vmatpush.msra.mxu0 %v17
    %46 = vmatmul.f32.gmra.mxu0 %v25
    %v47 = vpop.f32.mrf.mxu0
    %v48 = vadd.f32 %v21, %v47
    %49 = vmatmul.f32.gmra.mxu0 %v28
    %v50 = vpop.f32.mrf.mxu0
    %v51 = vadd.f32 %v22, %v50
    %52 = vdwg.mxu0
    %v53 = vlaneseq
    %v54 = vshrl.u32 %v53, 7
    %v55 = vadd.s32 %v54, 8
    %vm56 = vcmp.lt.s32.totalorder %v54, 0
    %v57 = vsub.s32 0, %v54
    %v58 = vsel %vm56, %v57, %v54
    %v59 = vshrl.u32 %v58, 3
    %v60 = vand.u32 %v58, 7
    %v61 = vsub.s32 0, %v60
    %v62 = vsel %vm56, %v61, %v60
    %vm63 = vcmp.lt.s32.totalorder %v55, 0
    %v64 = vsub.s32 0, %v55
    %v65 = vsel %vm63, %v64, %v55
    %v66 = vshrl.u32 %v65, 3
    %v67 = vand.u32 %v65, 7
    %v68 = vsub.s32 0, %v67
    %v69 = vsel %vm63, %v68, %v67
    %vm70 = vcmp.ne.s32.totalorder %v62, 0
    %vm71 = vcmp.ne.s32.totalorder %v69, 0
    %vm72 = vcmp.lt.s32.totalorder %v62, 0
    %vm73 = vcmp.lt.s32.totalorder %v69, 0
    %vm74 = vmand %vm72, %vm70
    %vm75 = vmand %vm73, %vm71
    %v76 = vadd.s32 %v62, 8
    %v77 = vadd.s32 %v69, 8
    %v78 = vsel %vm74, %v76, %v62
    %v79 = vsel %vm75, %v77, %v69
    %vm80 = vcmp.ne.s32.totalorder %v78, 0
    %vm81 = vcmp.ne.s32.totalorder %v79, 0
    %vm82 = vcmp.ne.s32.totalorder %v78, 7
    %vm83 = vcmp.ne.s32.totalorder %v79, 7
    %v84 = vsel %vm23, %v48, 0.0
    %85 = vadd.xlane.f32.xlu0 %v84
    %v86 = vpop.xlane.xlu0 %85
    %v87 = vsel %vm23, %v51, 0.0
    %88 = vadd.xlane.f32.xlu0 %v87
    %v89 = vpop.xlane.xlu0 %88
    %v90 = vrcp.pop 32.0
    %v91 = vmul.f32 32.0, %v90
    %v92 = vsub.f32 1.0, %v91
    %v93 = vmul.f32 %v90, %v92
    %v94 = vadd.f32 %v90, %v93
    %vm95 = vweird.f32 %v90
    %v96 = vsel %vm95, %v90, %v94
    %v97 = vmul.f32 %v86, %v96
    %v98 = vmul.f32 %v89, %v96
    %v99 = vsub.f32 %v48, %v97
    %v100 = vsub.f32 %v51, %v98
    %v101 = vmul.f32 %v99, %v99
    %v102 = vmul.f32 %v100, %v100
    %v103 = vsel %vm23, %v101, 0.0
    %104 = vadd.xlane.f32.xlu0 %v103
    %v105 = vpop.xlane.xlu0 %104
    %v106 = vsel %vm23, %v102, 0.0
    %107 = vadd.xlane.f32.xlu0 %v106
    %v108 = vpop.xlane.xlu0 %107
    %v109 = vrcp.pop 31.0
    %v110 = vmul.f32 31.0, %v109
    %v111 = vsub.f32 1.0, %v110
    %v112 = vmul.f32 %v109, %v111
    %v113 = vadd.f32 %v109, %v112
    %vm114 = vweird.f32 %v109
    %v115 = vsel %vm114, %v109, %v113
    %v116 = vmul.f32 %v105, %v115
    %v117 = vmul.f32 %v108, %v115
    %v118 = vrsqrt.pop %v116
    %v119 = vmul.f32 %v118, %v116
    %v120 = vmul.f32 %v119, %v118
    %v121 = vmul.f32 0.5, %v120
    %v122 = vsub.f32 1.5, %v121
    %v123 = vmul.f32 %v118, %v122
    %v124 = vmul.f32 %v116, %v123
    %vm125 = vcmp.eq.f32.partialorder %v116, inf
    %v126 = vsel %vm125, %v116, %v124
    %vm127 = vcmp.eq.f32.partialorder %v116, 0.0
    %v128 = vand.u32 %v116, 2147483648
    %v129 = vsel %vm127, %v128, %v126
    %v130 = vrsqrt.pop %v117
    %v131 = vmul.f32 %v130, %v117
    %v132 = vmul.f32 %v131, %v130
    %v133 = vmul.f32 0.5, %v132
    %v134 = vsub.f32 1.5, %v133
    %v135 = vmul.f32 %v130, %v134
    %v136 = vmul.f32 %v117, %v135
    %vm137 = vcmp.eq.f32.partialorder %v117, inf
    %v138 = vsel %vm137, %v117, %v136
    %vm139 = vcmp.eq.f32.partialorder %v117, 0.0
    %v140 = vand.u32 %v117, 2147483648
    %v141 = vsel %vm139, %v140, %v138
    %v142 = vadd.f32 %v129, 1e-06
    %v143 = vadd.f32 %v141, 1e-06
    %v144 = vrcp.pop %v142
    %v145 = vmul.f32 %v142, %v144
    %v146 = vsub.f32 1.0, %v145
    %v147 = vmul.f32 %v144, %v146
    %v148 = vadd.f32 %v144, %v147
    %vm149 = vweird.f32 %v142
    %vm150 = vweird.f32 %v144
    %vm151 = vmor %vm149, %vm150
    %v152 = vsel %vm151, %v144, %v148
    %v153 = vand.u32 2147483647, %v142
    %vm154 = vcmp.eq.f32.partialorder %v153, 8.507059e+37
    %v155 = vand.u32 %v142, 2147483648
    %v156 = vor.u32 1.1754944e-38, %v155
    %v157 = vsel %vm154, %v156, %v152
    %v158 = vrcp.pop %v143
    %v159 = vmul.f32 %v143, %v158
    %v160 = vsub.f32 1.0, %v159
    %v161 = vmul.f32 %v158, %v160
    %v162 = vadd.f32 %v158, %v161
    %vm163 = vweird.f32 %v143
    %vm164 = vweird.f32 %v158
    %vm165 = vmor %vm163, %vm164
    %v166 = vsel %vm165, %v158, %v162
    %v167 = vand.u32 2147483647, %v143
    %vm168 = vcmp.eq.f32.partialorder %v167, 8.507059e+37
    %v169 = vand.u32 %v143, 2147483648
    %v170 = vor.u32 1.1754944e-38, %v169
    %v171 = vsel %vm168, %v170, %v166
    %v172 = vmul.f32 %v99, %v157
    %v173 = vmul.f32 %v100, %v171
    %v174 = vld [vmem:[%s1] sm:$0xff]
    %v175 = vld [vmem:[%s1 + $0x8] sm:$0xff]
    %v176 = vld [vmem:[%s1 + $0x10] sm:$0xff]
    %v177 = vld [vmem:[%s1 + $0x18] sm:$0xff]
    %v178 = vld [vmem:[%s1 + $0x100] sm:$0x1]
    %v179 = vperm.slane %v178, 0
    %v181 = vsel %vm23, %v172, 0
    %v184 = vsel %vm23, %v173, 0
    %186 = vmatpush.msra.mxu0 0.0
    %187 = vmatpush.msra.mxu0 0.0
    %188 = vmatpush.msra.mxu0 0.0
    %189 = vmatpush.msra.mxu0 0.0
    %190 = vmatpush.msra.mxu0 0.0
    %191 = vmatpush.msra.mxu0 0.0
    %192 = vmatpush.msra.mxu0 0.0
    %193 = vmatpush.msra.mxu0 0.0
    %194 = vmatpush.msra.mxu0 0.0
    %195 = vmatpush.msra.mxu0 0.0
    %196 = vmatpush.msra.mxu0 0.0
    %197 = vmatpush.msra.mxu0 0.0
    %198 = vmatpush.msra.mxu0 %v177
    %199 = vmatpush.msra.mxu0 %v176
    %200 = vmatpush.msra.mxu0 %v175
    %201 = vmatpush.msra.mxu0 %v174
    %202 = vmatmul.f32.gmra.mxu0 %v181
    %v203 = vpop.f32.mrf.mxu0
    %v204 = vadd.f32 %v179, %v203
    %205 = vmatmul.f32.gmra.mxu0 %v184
    %v206 = vpop.f32.mrf.mxu0
    %v207 = vadd.f32 %v179, %v206
    %208 = vdwg.mxu0
    %211 = vrot.lane.b32.xlu0 %v204, 96
    %v212 = vpop.permute.xlu0 %211
    %213 = vrot.lane.b32.xlu0 %v207, 96
    %v214 = vpop.permute.xlu0 %213
    %215 = vrot.lane.b32.xlu0 %v15, 96
    %v216 = vpop.permute.xlu0 %215
    %217 = vrot.lane.b32.xlu0 %v16, 96
    %v218 = vpop.permute.xlu0 %217
    %vm221 = vcmask 130048
    %v222 = vsel %vm221, %v204, 0
    %v224 = vsel %vm221, %v207, 0
    %v226 = vsel %vm221, %v212, 0
    %v228 = vsel %vm221, %v214, 0
    %230 = vmatpush.xpose.msra.mxu0 0.0
    %231 = vmatpush.xpose.msra.mxu0 0.0
    %232 = vmatpush.xpose.msra.mxu0 0.0
    %233 = vmatpush.xpose.msra.mxu0 0.0
    %234 = vmatpush.xpose.msra.mxu0 0.0
    %235 = vmatpush.xpose.msra.mxu0 0.0
    %236 = vmatpush.xpose.msra.mxu0 0.0
    %237 = vmatpush.xpose.msra.mxu0 0.0
    %238 = vmatpush.xpose.msra.mxu0 0.0
    %239 = vmatpush.xpose.msra.mxu0 0.0
    %240 = vmatpush.xpose.msra.mxu0 0.0
    %241 = vmatpush.xpose.msra.mxu0 0.0
    %242 = vmatpush.xpose.msra.mxu0 0.0
    %243 = vmatpush.xpose.msra.mxu0 0.0
    %244 = vmatpush.xpose.msra.mxu0 %v228
    %245 = vmatpush.xpose.msra.mxu0 %v226
    %246 = vmatmul.f32.gmra.mxu0 %v222
    %v247 = vpop.f32.mrf.mxu0
    %v248 = vadd.f32 %v216, %v247
    %249 = vmatmul.f32.gmra.mxu0 %v224
    %v250 = vpop.f32.mrf.mxu0
    %v251 = vadd.f32 %v218, %v250
    %252 = vdwg.mxu0
    %v253 = vsel %vm221, %v248, -inf
    %254 = vmax.xlane.f32.xlu0 %v253
    %v255 = vpop.xlane.xlu0 %254
    %v256 = vsel %vm221, %v251, -inf
    %257 = vmax.xlane.f32.xlu0 %v256
    %v258 = vpop.xlane.xlu0 %257
    %v259 = vsub.f32 %v248, %v255
    %v260 = vsub.f32 %v251, %v258
    %v261 = vmul.f32 %v259, 1.442695
    %v262 = vpow.pop %v261
    %v263 = vmul.f32 %v260, 1.442695
    %v264 = vpow.pop %v263
    %v265 = vsel %vm221, %v262, 0.0
    %266 = vadd.xlane.f32.xlu0 %v265
    %v267 = vpop.xlane.xlu0 %266
    %v268 = vsel %vm221, %v264, 0.0
    %269 = vadd.xlane.f32.xlu0 %v268
    %v270 = vpop.xlane.xlu0 %269
    %v271 = vrcp.pop %v267
    %v272 = vrcp.pop %v270
    %v273 = vmul.f32 %v262, %v271
    %v274 = vmul.f32 %v264, %v272
    %275 = vrot.lane.b32.xlu0 %v204, 64
    %v276 = vpop.permute.xlu0 %275
    %277 = vrot.lane.b32.xlu0 %v207, 64
    %v278 = vpop.permute.xlu0 %277
    %v282 = vsel %vm221, %v273, 0
    %v285 = vsel %vm221, %v274, 0
    %287 = vmatpush.msra.mxu0 0.0
    %288 = vmatpush.msra.mxu0 0.0
    %289 = vmatpush.msra.mxu0 0.0
    %290 = vmatpush.msra.mxu0 0.0
    %291 = vmatpush.msra.mxu0 0.0
    %292 = vmatpush.msra.mxu0 0.0
    %293 = vmatpush.msra.mxu0 0.0
    %294 = vmatpush.msra.mxu0 0.0
    %295 = vmatpush.msra.mxu0 0.0
    %296 = vmatpush.msra.mxu0 0.0
    %297 = vmatpush.msra.mxu0 0.0
    %298 = vmatpush.msra.mxu0 0.0
    %299 = vmatpush.msra.mxu0 0.0
    %300 = vmatpush.msra.mxu0 0.0
    %301 = vmatpush.msra.mxu0 %v278
    %302 = vmatpush.msra.mxu0 %v276
    %303 = vmatmul.f32.gmra.mxu0 %v282
    %v304 = vpop.f32.mrf.mxu0
    %v305 = vadd.f32 0.0, %v304
    %306 = vmatmul.f32.gmra.mxu0 %v285
    %v307 = vpop.f32.mrf.mxu0
    %v308 = vadd.f32 0.0, %v307
    %309 = vdwg.mxu0
    %310 = vrot.lane.b32.xlu0 %v204, 112
    %v311 = vpop.permute.xlu0 %310
    %312 = vrot.lane.b32.xlu0 %v207, 112
    %v313 = vpop.permute.xlu0 %312
    %314 = vrot.lane.b32.xlu0 %v204, 80
    %v315 = vpop.permute.xlu0 %314
    %316 = vrot.lane.b32.xlu0 %v207, 80
    %v317 = vpop.permute.xlu0 %316
    %v318 = vsel %vm221, %v311, 0
    %v320 = vsel %vm221, %v313, 0
    %v322 = vsel %vm221, %v315, 0
    %v324 = vsel %vm221, %v317, 0
    %326 = vmatpush.xpose.msra.mxu0 0.0
    %327 = vmatpush.xpose.msra.mxu0 0.0
    %328 = vmatpush.xpose.msra.mxu0 0.0
    %329 = vmatpush.xpose.msra.mxu0 0.0
    %330 = vmatpush.xpose.msra.mxu0 0.0
    %331 = vmatpush.xpose.msra.mxu0 0.0
    %332 = vmatpush.xpose.msra.mxu0 0.0
    %333 = vmatpush.xpose.msra.mxu0 0.0
    %334 = vmatpush.xpose.msra.mxu0 0.0
    %335 = vmatpush.xpose.msra.mxu0 0.0
    %336 = vmatpush.xpose.msra.mxu0 0.0
    %337 = vmatpush.xpose.msra.mxu0 0.0
    %338 = vmatpush.xpose.msra.mxu0 0.0
    %339 = vmatpush.xpose.msra.mxu0 0.0
    %340 = vmatpush.xpose.msra.mxu0 %v324
    %341 = vmatpush.xpose.msra.mxu0 %v322
    %342 = vmatmul.f32.gmra.mxu0 %v318
    %v343 = vpop.f32.mrf.mxu0
    %v344 = vadd.f32 %v216, %v343
    %345 = vmatmul.f32.gmra.mxu0 %v320
    %v346 = vpop.f32.mrf.mxu0
    %v347 = vadd.f32 %v218, %v346
    %348 = vdwg.mxu0
    %v349 = vsel %vm221, %v344, -inf
    %350 = vmax.xlane.f32.xlu0 %v349
    %v351 = vpop.xlane.xlu0 %350
    %v352 = vsel %vm221, %v347, -inf
    %353 = vmax.xlane.f32.xlu0 %v352
    %v354 = vpop.xlane.xlu0 %353
    %v355 = vsub.f32 %v344, %v351
    %v356 = vsub.f32 %v347, %v354
    %v357 = vmul.f32 %v355, 1.442695
    %v358 = vpow.pop %v357
    %v359 = vmul.f32 %v356, 1.442695
    %v360 = vpow.pop %v359
    %v361 = vsel %vm221, %v358, 0.0
    %362 = vadd.xlane.f32.xlu0 %v361
    %v363 = vpop.xlane.xlu0 %362
    %v364 = vsel %vm221, %v360, 0.0
    %365 = vadd.xlane.f32.xlu0 %v364
    %v366 = vpop.xlane.xlu0 %365
    %v367 = vrcp.pop %v363
    %v368 = vrcp.pop %v366
    %v369 = vmul.f32 %v358, %v367
    %v370 = vmul.f32 %v360, %v368
    %371 = vrot.lane.b32.xlu0 %v204, 48
    %v372 = vpop.permute.xlu0 %371
    %373 = vrot.lane.b32.xlu0 %v207, 48
    %v374 = vpop.permute.xlu0 %373
    %v378 = vsel %vm221, %v369, 0
    %v381 = vsel %vm221, %v370, 0
    %383 = vmatpush.msra.mxu0 0.0
    %384 = vmatpush.msra.mxu0 0.0
    %385 = vmatpush.msra.mxu0 0.0
    %386 = vmatpush.msra.mxu0 0.0
    %387 = vmatpush.msra.mxu0 0.0
    %388 = vmatpush.msra.mxu0 0.0
    %389 = vmatpush.msra.mxu0 0.0
    %390 = vmatpush.msra.mxu0 0.0
    %391 = vmatpush.msra.mxu0 0.0
    %392 = vmatpush.msra.mxu0 0.0
    %393 = vmatpush.msra.mxu0 0.0
    %394 = vmatpush.msra.mxu0 0.0
    %395 = vmatpush.msra.mxu0 0.0
    %396 = vmatpush.msra.mxu0 0.0
    %397 = vmatpush.msra.mxu0 %v374
    %398 = vmatpush.msra.mxu0 %v372
    %399 = vmatmul.f32.gmra.mxu0 %v378
    %v400 = vpop.f32.mrf.mxu0
    %v401 = vadd.f32 0.0, %v400
    %402 = vmatmul.f32.gmra.mxu0 %v381
    %v403 = vpop.f32.mrf.mxu0
    %v404 = vadd.f32 0.0, %v403
    %405 = vdwg.mxu0
    %408 = vrot.lane.b32.xlu0 %v401, 16
    %v409 = vpop.permute.xlu0 %408
    %410 = vrot.lane.b32.xlu0 %v404, 16
    %v411 = vpop.permute.xlu0 %410
    %v414 = vsel %vm221, %v305, %v409
    %v415 = vsel %vm221, %v308, %v411
    %v416 = vld [vmem:[%s2 + $0x30] sm:$0xff]
    %v417 = vld [vmem:[%s2 + $0x38] sm:$0xff]
    %v418 = vld [vmem:[%s2 + $0x40] sm:$0xff]
    %v419 = vld [vmem:[%s2 + $0x48] sm:$0xff]
    %v421 = vsel %vm23, %v414, 0
    %v424 = vsel %vm23, %v415, 0
    %426 = vmatpush.msra.mxu0 0.0
    %427 = vmatpush.msra.mxu0 0.0
    %428 = vmatpush.msra.mxu0 0.0
    %429 = vmatpush.msra.mxu0 0.0
    %430 = vmatpush.msra.mxu0 0.0
    %431 = vmatpush.msra.mxu0 0.0
    %432 = vmatpush.msra.mxu0 0.0
    %433 = vmatpush.msra.mxu0 0.0
    %434 = vmatpush.msra.mxu0 0.0
    %435 = vmatpush.msra.mxu0 0.0
    %436 = vmatpush.msra.mxu0 0.0
    %437 = vmatpush.msra.mxu0 0.0
    %438 = vmatpush.msra.mxu0 %v419
    %439 = vmatpush.msra.mxu0 %v418
    %440 = vmatpush.msra.mxu0 %v417
    %441 = vmatpush.msra.mxu0 %v416
    %442 = vmatmul.f32.gmra.mxu0 %v421
    %v443 = vpop.f32.mrf.mxu0
    %v444 = vadd.f32 0.0, %v443
    %445 = vmatmul.f32.gmra.mxu0 %v424
    %v446 = vpop.f32.mrf.mxu0
    %v447 = vadd.f32 0.0, %v446
    %448 = vdwg.mxu0
    %v449 = vadd.f32 %v48, %v444
    %v450 = vadd.f32 %v51, %v447
    %v451 = vld [vmem:[%s1 + $0x101] sm:$0x1]
    %v452 = vsel %vm23, %v449, 0.0
    %453 = vadd.xlane.f32.xlu0 %v452
    %v454 = vpop.xlane.xlu0 %453
    %v455 = vsel %vm23, %v450, 0.0
    %456 = vadd.xlane.f32.xlu0 %v455
    %v457 = vpop.xlane.xlu0 %456
    %v458 = vmul.f32 %v454, %v96
    %v459 = vmul.f32 %v457, %v96
    %v460 = vsub.f32 %v449, %v458
    %v461 = vsub.f32 %v450, %v459
    %v462 = vmul.f32 %v460, %v460
    %v463 = vmul.f32 %v461, %v461
    %v464 = vsel %vm23, %v462, 0.0
    %465 = vadd.xlane.f32.xlu0 %v464
    %v466 = vpop.xlane.xlu0 %465
    %v467 = vsel %vm23, %v463, 0.0
    %468 = vadd.xlane.f32.xlu0 %v467
    %v469 = vpop.xlane.xlu0 %468
    %v470 = vmul.f32 %v466, %v115
    %v471 = vmul.f32 %v469, %v115
    %v472 = vrsqrt.pop %v470
    %v473 = vmul.f32 %v472, %v470
    %v474 = vmul.f32 %v473, %v472
    %v475 = vmul.f32 0.5, %v474
    %v476 = vsub.f32 1.5, %v475
    %v477 = vmul.f32 %v472, %v476
    %v478 = vmul.f32 %v470, %v477
    %vm479 = vcmp.eq.f32.partialorder %v470, inf
    %v480 = vsel %vm479, %v470, %v478
    %vm481 = vcmp.eq.f32.partialorder %v470, 0.0
    %v482 = vand.u32 %v470, 2147483648
    %v483 = vsel %vm481, %v482, %v480
    %v484 = vrsqrt.pop %v471
    %v485 = vmul.f32 %v484, %v471
    %v486 = vmul.f32 %v485, %v484
    %v487 = vmul.f32 0.5, %v486
    %v488 = vsub.f32 1.5, %v487
    %v489 = vmul.f32 %v484, %v488
    %v490 = vmul.f32 %v471, %v489
    %vm491 = vcmp.eq.f32.partialorder %v471, inf
    %v492 = vsel %vm491, %v471, %v490
    %vm493 = vcmp.eq.f32.partialorder %v471, 0.0
    %v494 = vand.u32 %v471, 2147483648
    %v495 = vsel %vm493, %v494, %v492
    %v496 = vadd.f32 %v483, 1e-06
    %v497 = vadd.f32 %v495, 1e-06
    %v498 = vrcp.pop %v496
    %v499 = vmul.f32 %v496, %v498
    %v500 = vsub.f32 1.0, %v499
    %v501 = vmul.f32 %v498, %v500
    %v502 = vadd.f32 %v498, %v501
    %vm503 = vweird.f32 %v496
    %vm504 = vweird.f32 %v498
    %vm505 = vmor %vm503, %vm504
    %v506 = vsel %vm505, %v498, %v502
    %v507 = vand.u32 2147483647, %v496
    %vm508 = vcmp.eq.f32.partialorder %v507, 8.507059e+37
    %v509 = vand.u32 %v496, 2147483648
    %v510 = vor.u32 1.1754944e-38, %v509
    %v511 = vsel %vm508, %v510, %v506
    %v512 = vrcp.pop %v497
    %v513 = vmul.f32 %v497, %v512
    %v514 = vsub.f32 1.0, %v513
    %v515 = vmul.f32 %v512, %v514
    %v516 = vadd.f32 %v512, %v515
    %vm517 = vweird.f32 %v497
    %vm518 = vweird.f32 %v512
    %vm519 = vmor %vm517, %vm518
    %v520 = vsel %vm519, %v512, %v516
    %v521 = vand.u32 2147483647, %v497
    %vm522 = vcmp.eq.f32.partialorder %v521, 8.507059e+37
    %v523 = vand.u32 %v497, 2147483648
    %v524 = vor.u32 1.1754944e-38, %v523
    %v525 = vsel %vm522, %v524, %v520
    %v526 = vmul.f32 %v460, %v511
    %v527 = vmul.f32 %v461, %v525
    %v528 = vperm.slane %v451, 0
    %v529 = vmul.f32 %v528, %v526
    %v530 = vmul.f32 %v528, %v527
    %v531 = vld [vmem:[%s1 + $0x102] sm:$0x1]
    %v532 = vperm.slane %v531, 0
    %v533 = vadd.f32 %v529, %v532
    %v534 = vadd.f32 %v530, %v532
    %v535 = vrot.slane %v533, 7
    %v536 = vrot.slane %v534, 7
    %vm537 = vcmp.lt.s32.totalorder %v54, 1
    %v538 = vsel %vm537, %v535, %v536
    %v539 = vsel %vm537, %v536, %v535
    %v540 = vsel %vm80, 1, 0
    %v541 = vsel %vm81, 1, 0
    %vm542 = vcmp.eq.s32.totalorder %v540, 1
    %vm543 = vcmp.eq.s32.totalorder %v541, 1
    %v544 = vsel %vm542, %v539, 0.0
    %v545 = vsel %vm543, %v538, 0.0
    %v546 = vrot.slane %v533, 1
    %v547 = vrot.slane %v534, 1
    %vm548 = vcmp.lt.s32.totalorder %v54, 7
    %v549 = vsel %vm548, %v546, %v547
    %v550 = vsel %vm548, %v547, %v546
    %v551 = vsel %vm82, 1, 0
    %v552 = vsel %vm83, 1, 0
    %vm553 = vcmp.eq.s32.totalorder %v551, 1
    %vm554 = vcmp.eq.s32.totalorder %v552, 1
    %v555 = vsel %vm553, %v549, 0.0
    %v556 = vsel %vm554, %v550, 0.0
    %559 = vrot.lane.b32.xlu0 %v533, 32
    %v560 = vpop.permute.xlu0 %559
    %561 = vrot.lane.b32.xlu0 %v534, 32
    %v562 = vpop.permute.xlu0 %561
    %567 = vrot.lane.b32.xlu0 %v555, 64
    %v568 = vpop.permute.xlu0 %567
    %569 = vrot.lane.b32.xlu0 %v556, 64
    %v570 = vpop.permute.xlu0 %569
    %v573 = vsel %vm23, %v544, %v560
    %v574 = vsel %vm23, %v545, %v562
    %vm575 = vcmask 523264
    %v576 = vsel %vm575, %v573, %v568
    %v577 = vsel %vm575, %v574, %v570
    %v578 = vld [vmem:[%s1 + $0x40] sm:$0xff]
    %v579 = vld [vmem:[%s1 + $0x48] sm:$0xff]
    %v580 = vld [vmem:[%s1 + $0x50] sm:$0xff]
    %v581 = vld [vmem:[%s1 + $0x58] sm:$0xff]
    %v582 = vld [vmem:[%s1 + $0x60] sm:$0xff]
    %v583 = vld [vmem:[%s1 + $0x68] sm:$0xff]
    %v584 = vld [vmem:[%s1 + $0x70] sm:$0xff]
    %v585 = vld [vmem:[%s1 + $0x78] sm:$0xff]
    %v586 = vld [vmem:[%s1 + $0x80] sm:$0xff]
    %v587 = vld [vmem:[%s1 + $0x88] sm:$0xff]
    %v588 = vld [vmem:[%s1 + $0x90] sm:$0xff]
    %v589 = vld [vmem:[%s1 + $0x98] sm:$0xff]
    %v590 = vld [vmem:[%s1 + $0x103] sm:$0x1]
    %v591 = vperm.slane %v590, 0
    %vm592 = vcmask 785408
    %v594 = vsel %vm592, %v576, 0
    %v597 = vsel %vm592, %v577, 0
    %599 = vmatpush.msra.mxu0 0.0
    %600 = vmatpush.msra.mxu0 0.0
    %601 = vmatpush.msra.mxu0 0.0
    %602 = vmatpush.msra.mxu0 0.0
    %603 = vmatpush.msra.mxu0 %v589
    %604 = vmatpush.msra.mxu0 %v588
    %605 = vmatpush.msra.mxu0 %v587
    %606 = vmatpush.msra.mxu0 %v586
    %607 = vmatpush.msra.mxu0 %v585
    %608 = vmatpush.msra.mxu0 %v584
    %609 = vmatpush.msra.mxu0 %v583
    %610 = vmatpush.msra.mxu0 %v582
    %611 = vmatpush.msra.mxu0 %v581
    %612 = vmatpush.msra.mxu0 %v580
    %613 = vmatpush.msra.mxu0 %v579
    %614 = vmatpush.msra.mxu0 %v578
    %615 = vmatmul.f32.gmra.mxu0 %v594
    %v616 = vpop.f32.mrf.mxu0
    %v617 = vadd.f32 %v591, %v616
    %618 = vmatmul.f32.gmra.mxu0 %v597
    %v619 = vpop.f32.mrf.mxu0
    %v620 = vadd.f32 %v591, %v619
    %621 = vdwg.mxu0
    %v622 = vmax.f32 %v617, 0.0
    %v623 = vmax.f32 %v620, 0.0
    %v624 = vrot.slane %v622, 7
    %v625 = vrot.slane %v623, 7
    %v626 = vsel %vm537, %v624, %v625
    %v627 = vsel %vm537, %v625, %v624
    %v628 = vsel %vm542, %v627, 0.0
    %v629 = vsel %vm543, %v626, 0.0
    %v630 = vrot.slane %v622, 1
    %v631 = vrot.slane %v623, 1
    %v632 = vsel %vm548, %v630, %v631
    %v633 = vsel %vm548, %v631, %v630
    %v634 = vsel %vm553, %v632, 0.0
    %v635 = vsel %vm554, %v633, 0.0
    %638 = vrot.lane.b32.xlu0 %v622, 64
    %v639 = vpop.permute.xlu0 %638
    %640 = vrot.lane.b32.xlu0 %v623, 64
    %v641 = vpop.permute.xlu0 %640
    %v644 = vsel %vm575, %v628, %v639
    %v645 = vsel %vm575, %v629, %v641
    %v646 = vld [vmem:[%s2 + $0x70] sm:$0xff]
    %v647 = vld [vmem:[%s2 + $0x78] sm:$0xff]
    %v648 = vld [vmem:[%s2 + $0x80] sm:$0xff]
    %v649 = vld [vmem:[%s2 + $0x88] sm:$0xff]
    %v650 = vld [vmem:[%s2 + $0x90] sm:$0xff]
    %v651 = vld [vmem:[%s2 + $0x98] sm:$0xff]
    %v652 = vld [vmem:[%s2 + $0xa0] sm:$0xff]
    %v653 = vld [vmem:[%s2 + $0xa8] sm:$0xff]
    %v654 = vld [vmem:[%s2 + $0xb0] sm:$0xff]
    %v655 = vld [vmem:[%s2 + $0xb8] sm:$0xff]
    %v656 = vld [vmem:[%s2 + $0xc0] sm:$0xff]
    %v657 = vld [vmem:[%s2 + $0xc8] sm:$0xff]
    %v658 = vld [vmem:[%s2 + $0xd0] sm:$0xff]
    %v659 = vld [vmem:[%s2 + $0xd8] sm:$0xff]
    %v660 = vld [vmem:[%s2 + $0xe0] sm:$0xff]
    %v661 = vld [vmem:[%s2 + $0xe8] sm:$0xff]
    %v662 = vld [vmem:[%s2 + $0xf0] sm:$0xff]
    %v663 = vld [vmem:[%s2 + $0xf8] sm:$0xff]
    %v664 = vld [vmem:[%s2 + $0x100] sm:$0xff]
    %v665 = vld [vmem:[%s2 + $0x108] sm:$0xff]
    %v666 = vld [vmem:[%s2 + $0x110] sm:$0xff]
    %v667 = vld [vmem:[%s2 + $0x118] sm:$0xff]
    %v668 = vld [vmem:[%s2 + $0x120] sm:$0xff]
    %v669 = vld [vmem:[%s2 + $0x128] sm:$0xff]
    %v670 = vld [vmem:[%s1 + $0x104] sm:$0x1]
    %v671 = vperm.slane %v670, 0
    %v673 = vsel %vm575, %v634, 0
    %v676 = vsel %vm575, %v635, 0
    %678 = vmatpush.msra.mxu0 %v661
    %679 = vmatpush.msra.mxu0 %v660
    %680 = vmatpush.msra.mxu0 %v659
    %681 = vmatpush.msra.mxu0 %v658
    %682 = vmatpush.msra.mxu0 %v657
    %683 = vmatpush.msra.mxu0 %v656
    %684 = vmatpush.msra.mxu0 %v655
    %685 = vmatpush.msra.mxu0 %v654
    %686 = vmatpush.msra.mxu0 %v653
    %687 = vmatpush.msra.mxu0 %v652
    %688 = vmatpush.msra.mxu0 %v651
    %689 = vmatpush.msra.mxu0 %v650
    %690 = vmatpush.msra.mxu0 %v649
    %691 = vmatpush.msra.mxu0 %v648
    %692 = vmatpush.msra.mxu0 %v647
    %693 = vmatpush.msra.mxu0 %v646
    %694 = vmatmul.f32.gmra.mxu0 %v644
    %v695 = vpop.f32.mrf.mxu0
    %v696 = vadd.f32 %v671, %v695
    %697 = vmatmul.f32.gmra.mxu0 %v645
    %v698 = vpop.f32.mrf.mxu0
    %v699 = vadd.f32 %v671, %v698
    %700 = vdwg.mxu0
    %701 = vmatpush.msra.mxu0 0.0
    %702 = vmatpush.msra.mxu0 0.0
    %703 = vmatpush.msra.mxu0 0.0
    %704 = vmatpush.msra.mxu0 0.0
    %705 = vmatpush.msra.mxu0 0.0
    %706 = vmatpush.msra.mxu0 0.0
    %707 = vmatpush.msra.mxu0 0.0
    %708 = vmatpush.msra.mxu0 0.0
    %709 = vmatpush.msra.mxu0 %v669
    %710 = vmatpush.msra.mxu0 %v668
    %711 = vmatpush.msra.mxu0 %v667
    %712 = vmatpush.msra.mxu0 %v666
    %713 = vmatpush.msra.mxu0 %v665
    %714 = vmatpush.msra.mxu0 %v664
    %715 = vmatpush.msra.mxu0 %v663
    %716 = vmatpush.msra.mxu0 %v662
    %717 = vmatmul.f32.gmra.mxu0 %v673
    %v718 = vpop.f32.mrf.mxu0
    %v719 = vadd.f32 %v696, %v718
    %720 = vmatmul.f32.gmra.mxu0 %v676
    %v721 = vpop.f32.mrf.mxu0
    %v722 = vadd.f32 %v699, %v721
    %723 = vdwg.mxu0
    %v724 = vmax.f32 %v719, 0.0
    %v725 = vmax.f32 %v722, 0.0
    %v726 = vadd.f32 %v449, %v724
    %v727 = vadd.f32 %v450, %v725
    %v728 = vsel %vm23, %v726, 0.0
    %729 = vadd.xlane.f32.xlu0 %v728
    %v730 = vpop.xlane.xlu0 %729
    %v731 = vsel %vm23, %v727, 0.0
    %732 = vadd.xlane.f32.xlu0 %v731
    %v733 = vpop.xlane.xlu0 %732
    %v734 = vmul.f32 %v730, %v96
    %v735 = vmul.f32 %v733, %v96
    %v736 = vsub.f32 %v726, %v734
    %v737 = vsub.f32 %v727, %v735
    %v738 = vmul.f32 %v736, %v736
    %v739 = vmul.f32 %v737, %v737
    %v740 = vsel %vm23, %v738, 0.0
    %741 = vadd.xlane.f32.xlu0 %v740
    %v742 = vpop.xlane.xlu0 %741
    %v743 = vsel %vm23, %v739, 0.0
    %744 = vadd.xlane.f32.xlu0 %v743
    %v745 = vpop.xlane.xlu0 %744
    %v746 = vmul.f32 %v742, %v115
    %v747 = vmul.f32 %v745, %v115
    %v748 = vrsqrt.pop %v746
    %v749 = vmul.f32 %v748, %v746
    %v750 = vmul.f32 %v749, %v748
    %v751 = vmul.f32 0.5, %v750
    %v752 = vsub.f32 1.5, %v751
    %v753 = vmul.f32 %v748, %v752
    %v754 = vmul.f32 %v746, %v753
    %vm755 = vcmp.eq.f32.partialorder %v746, inf
    %v756 = vsel %vm755, %v746, %v754
    %vm757 = vcmp.eq.f32.partialorder %v746, 0.0
    %v758 = vand.u32 %v746, 2147483648
    %v759 = vsel %vm757, %v758, %v756
    %v760 = vrsqrt.pop %v747
    %v761 = vmul.f32 %v760, %v747
    %v762 = vmul.f32 %v761, %v760
    %v763 = vmul.f32 0.5, %v762
    %v764 = vsub.f32 1.5, %v763
    %v765 = vmul.f32 %v760, %v764
    %v766 = vmul.f32 %v747, %v765
    %vm767 = vcmp.eq.f32.partialorder %v747, inf
    %v768 = vsel %vm767, %v747, %v766
    %vm769 = vcmp.eq.f32.partialorder %v747, 0.0
    %v770 = vand.u32 %v747, 2147483648
    %v771 = vsel %vm769, %v770, %v768
    %v772 = vadd.f32 %v759, 1e-06
    %v773 = vadd.f32 %v771, 1e-06
    %v774 = vrcp.pop %v772
    %v775 = vmul.f32 %v772, %v774
    %v776 = vsub.f32 1.0, %v775
    %v777 = vmul.f32 %v774, %v776
    %v778 = vadd.f32 %v774, %v777
    %vm779 = vweird.f32 %v772
    %vm780 = vweird.f32 %v774
    %vm781 = vmor %vm779, %vm780
    %v782 = vsel %vm781, %v774, %v778
    %v783 = vand.u32 2147483647, %v772
    %vm784 = vcmp.eq.f32.partialorder %v783, 8.507059e+37
    %v785 = vand.u32 %v772, 2147483648
    %v786 = vor.u32 1.1754944e-38, %v785
    %v787 = vsel %vm784, %v786, %v782
    %v788 = vrcp.pop %v773
    %v789 = vmul.f32 %v773, %v788
    %v790 = vsub.f32 1.0, %v789
    %v791 = vmul.f32 %v788, %v790
    %v792 = vadd.f32 %v788, %v791
    %vm793 = vweird.f32 %v773
    %vm794 = vweird.f32 %v788
    %vm795 = vmor %vm793, %vm794
    %v796 = vsel %vm795, %v788, %v792
    %v797 = vand.u32 2147483647, %v773
    %vm798 = vcmp.eq.f32.partialorder %v797, 8.507059e+37
    %v799 = vand.u32 %v773, 2147483648
    %v800 = vor.u32 1.1754944e-38, %v799
    %v801 = vsel %vm798, %v800, %v796
    %v802 = vmul.f32 %v736, %v787
    %v803 = vmul.f32 %v737, %v801
    %v804 = vld [vmem:[%s1 + $0x20] sm:$0xff]
    %v805 = vld [vmem:[%s1 + $0x28] sm:$0xff]
    %v806 = vld [vmem:[%s1 + $0x30] sm:$0xff]
    %v807 = vld [vmem:[%s1 + $0x38] sm:$0xff]
    %v808 = vld [vmem:[%s1 + $0x108] sm:$0x1]
    %v809 = vperm.slane %v808, 0
    %v811 = vsel %vm23, %v802, 0
    %v814 = vsel %vm23, %v803, 0
    %816 = vmatpush.msra.mxu0 0.0
    %817 = vmatpush.msra.mxu0 0.0
    %818 = vmatpush.msra.mxu0 0.0
    %819 = vmatpush.msra.mxu0 0.0
    %820 = vmatpush.msra.mxu0 0.0
    %821 = vmatpush.msra.mxu0 0.0
    %822 = vmatpush.msra.mxu0 0.0
    %823 = vmatpush.msra.mxu0 0.0
    %824 = vmatpush.msra.mxu0 0.0
    %825 = vmatpush.msra.mxu0 0.0
    %826 = vmatpush.msra.mxu0 0.0
    %827 = vmatpush.msra.mxu0 0.0
    %828 = vmatpush.msra.mxu0 %v807
    %829 = vmatpush.msra.mxu0 %v806
    %830 = vmatpush.msra.mxu0 %v805
    %831 = vmatpush.msra.mxu0 %v804
    %832 = vmatmul.f32.gmra.mxu0 %v811
    %v833 = vpop.f32.mrf.mxu0
    %v834 = vadd.f32 %v809, %v833
    %835 = vmatmul.f32.gmra.mxu0 %v814
    %v836 = vpop.f32.mrf.mxu0
    %v837 = vadd.f32 %v809, %v836
    %838 = vdwg.mxu0
    %841 = vrot.lane.b32.xlu0 %v834, 96
    %v842 = vpop.permute.xlu0 %841
    %843 = vrot.lane.b32.xlu0 %v837, 96
    %v844 = vpop.permute.xlu0 %843
    %v845 = vsel %vm221, %v834, 0
    %v847 = vsel %vm221, %v837, 0
    %v849 = vsel %vm221, %v842, 0
    %v851 = vsel %vm221, %v844, 0
    %853 = vmatpush.xpose.msra.mxu0 0.0
    %854 = vmatpush.xpose.msra.mxu0 0.0
    %855 = vmatpush.xpose.msra.mxu0 0.0
    %856 = vmatpush.xpose.msra.mxu0 0.0
    %857 = vmatpush.xpose.msra.mxu0 0.0
    %858 = vmatpush.xpose.msra.mxu0 0.0
    %859 = vmatpush.xpose.msra.mxu0 0.0
    %860 = vmatpush.xpose.msra.mxu0 0.0
    %861 = vmatpush.xpose.msra.mxu0 0.0
    %862 = vmatpush.xpose.msra.mxu0 0.0
    %863 = vmatpush.xpose.msra.mxu0 0.0
    %864 = vmatpush.xpose.msra.mxu0 0.0
    %865 = vmatpush.xpose.msra.mxu0 0.0
    %866 = vmatpush.xpose.msra.mxu0 0.0
    %867 = vmatpush.xpose.msra.mxu0 %v851
    %868 = vmatpush.xpose.msra.mxu0 %v849
    %869 = vmatmul.f32.gmra.mxu0 %v845
    %v870 = vpop.f32.mrf.mxu0
    %v871 = vadd.f32 %v216, %v870
    %872 = vmatmul.f32.gmra.mxu0 %v847
    %v873 = vpop.f32.mrf.mxu0
    %v874 = vadd.f32 %v218, %v873
    %875 = vdwg.mxu0
    %v876 = vsel %vm221, %v871, -inf
    %877 = vmax.xlane.f32.xlu0 %v876
    %v878 = vpop.xlane.xlu0 %877
    %v879 = vsel %vm221, %v874, -inf
    %880 = vmax.xlane.f32.xlu0 %v879
    %v881 = vpop.xlane.xlu0 %880
    %v882 = vsub.f32 %v871, %v878
    %v883 = vsub.f32 %v874, %v881
    %v884 = vmul.f32 %v882, 1.442695
    %v885 = vpow.pop %v884
    %v886 = vmul.f32 %v883, 1.442695
    %v887 = vpow.pop %v886
    %v888 = vsel %vm221, %v885, 0.0
    %889 = vadd.xlane.f32.xlu0 %v888
    %v890 = vpop.xlane.xlu0 %889
    %v891 = vsel %vm221, %v887, 0.0
    %892 = vadd.xlane.f32.xlu0 %v891
    %v893 = vpop.xlane.xlu0 %892
    %v894 = vrcp.pop %v890
    %v895 = vrcp.pop %v893
    %v896 = vmul.f32 %v885, %v894
    %v897 = vmul.f32 %v887, %v895
    %898 = vrot.lane.b32.xlu0 %v834, 64
    %v899 = vpop.permute.xlu0 %898
    %900 = vrot.lane.b32.xlu0 %v837, 64
    %v901 = vpop.permute.xlu0 %900
    %v905 = vsel %vm221, %v896, 0
    %v908 = vsel %vm221, %v897, 0
    %910 = vmatpush.msra.mxu0 0.0
    %911 = vmatpush.msra.mxu0 0.0
    %912 = vmatpush.msra.mxu0 0.0
    %913 = vmatpush.msra.mxu0 0.0
    %914 = vmatpush.msra.mxu0 0.0
    %915 = vmatpush.msra.mxu0 0.0
    %916 = vmatpush.msra.mxu0 0.0
    %917 = vmatpush.msra.mxu0 0.0
    %918 = vmatpush.msra.mxu0 0.0
    %919 = vmatpush.msra.mxu0 0.0
    %920 = vmatpush.msra.mxu0 0.0
    %921 = vmatpush.msra.mxu0 0.0
    %922 = vmatpush.msra.mxu0 0.0
    %923 = vmatpush.msra.mxu0 0.0
    %924 = vmatpush.msra.mxu0 %v901
    %925 = vmatpush.msra.mxu0 %v899
    %926 = vmatmul.f32.gmra.mxu0 %v905
    %v927 = vpop.f32.mrf.mxu0
    %v928 = vadd.f32 0.0, %v927
    %929 = vmatmul.f32.gmra.mxu0 %v908
    %v930 = vpop.f32.mrf.mxu0
    %v931 = vadd.f32 0.0, %v930
    %932 = vdwg.mxu0
    %933 = vrot.lane.b32.xlu0 %v834, 112
    %v934 = vpop.permute.xlu0 %933
    %935 = vrot.lane.b32.xlu0 %v837, 112
    %v936 = vpop.permute.xlu0 %935
    %937 = vrot.lane.b32.xlu0 %v834, 80
    %v938 = vpop.permute.xlu0 %937
    %939 = vrot.lane.b32.xlu0 %v837, 80
    %v940 = vpop.permute.xlu0 %939
    %v941 = vsel %vm221, %v934, 0
    %v943 = vsel %vm221, %v936, 0
    %v945 = vsel %vm221, %v938, 0
    %v947 = vsel %vm221, %v940, 0
    %949 = vmatpush.xpose.msra.mxu0 0.0
    %950 = vmatpush.xpose.msra.mxu0 0.0
    %951 = vmatpush.xpose.msra.mxu0 0.0
    %952 = vmatpush.xpose.msra.mxu0 0.0
    %953 = vmatpush.xpose.msra.mxu0 0.0
    %954 = vmatpush.xpose.msra.mxu0 0.0
    %955 = vmatpush.xpose.msra.mxu0 0.0
    %956 = vmatpush.xpose.msra.mxu0 0.0
    %957 = vmatpush.xpose.msra.mxu0 0.0
    %958 = vmatpush.xpose.msra.mxu0 0.0
    %959 = vmatpush.xpose.msra.mxu0 0.0
    %960 = vmatpush.xpose.msra.mxu0 0.0
    %961 = vmatpush.xpose.msra.mxu0 0.0
    %962 = vmatpush.xpose.msra.mxu0 0.0
    %963 = vmatpush.xpose.msra.mxu0 %v947
    %964 = vmatpush.xpose.msra.mxu0 %v945
    %965 = vmatmul.f32.gmra.mxu0 %v941
    %v966 = vpop.f32.mrf.mxu0
    %v967 = vadd.f32 %v216, %v966
    %968 = vmatmul.f32.gmra.mxu0 %v943
    %v969 = vpop.f32.mrf.mxu0
    %v970 = vadd.f32 %v218, %v969
    %971 = vdwg.mxu0
    %v972 = vsel %vm221, %v967, -inf
    %973 = vmax.xlane.f32.xlu0 %v972
    %v974 = vpop.xlane.xlu0 %973
    %v975 = vsel %vm221, %v970, -inf
    %976 = vmax.xlane.f32.xlu0 %v975
    %v977 = vpop.xlane.xlu0 %976
    %v978 = vsub.f32 %v967, %v974
    %v979 = vsub.f32 %v970, %v977
    %v980 = vmul.f32 %v978, 1.442695
    %v981 = vpow.pop %v980
    %v982 = vmul.f32 %v979, 1.442695
    %v983 = vpow.pop %v982
    %v984 = vsel %vm221, %v981, 0.0
    %985 = vadd.xlane.f32.xlu0 %v984
    %v986 = vpop.xlane.xlu0 %985
    %v987 = vsel %vm221, %v983, 0.0
    %988 = vadd.xlane.f32.xlu0 %v987
    %v989 = vpop.xlane.xlu0 %988
    %v990 = vrcp.pop %v986
    %v991 = vrcp.pop %v989
    %v992 = vmul.f32 %v981, %v990
    %v993 = vmul.f32 %v983, %v991
    %994 = vrot.lane.b32.xlu0 %v834, 48
    %v995 = vpop.permute.xlu0 %994
    %996 = vrot.lane.b32.xlu0 %v837, 48
    %v997 = vpop.permute.xlu0 %996
    %v1001 = vsel %vm221, %v992, 0
    %v1004 = vsel %vm221, %v993, 0
    %1006 = vmatpush.msra.mxu0 0.0
    %1007 = vmatpush.msra.mxu0 0.0
    %1008 = vmatpush.msra.mxu0 0.0
    %1009 = vmatpush.msra.mxu0 0.0
    %1010 = vmatpush.msra.mxu0 0.0
    %1011 = vmatpush.msra.mxu0 0.0
    %1012 = vmatpush.msra.mxu0 0.0
    %1013 = vmatpush.msra.mxu0 0.0
    %1014 = vmatpush.msra.mxu0 0.0
    %1015 = vmatpush.msra.mxu0 0.0
    %1016 = vmatpush.msra.mxu0 0.0
    %1017 = vmatpush.msra.mxu0 0.0
    %1018 = vmatpush.msra.mxu0 0.0
    %1019 = vmatpush.msra.mxu0 0.0
    %1020 = vmatpush.msra.mxu0 %v997
    %1021 = vmatpush.msra.mxu0 %v995
    %1022 = vmatmul.f32.gmra.mxu0 %v1001
    %v1023 = vpop.f32.mrf.mxu0
    %v1024 = vadd.f32 0.0, %v1023
    %1025 = vmatmul.f32.gmra.mxu0 %v1004
    %v1026 = vpop.f32.mrf.mxu0
    %v1027 = vadd.f32 0.0, %v1026
    %1028 = vdwg.mxu0
    %1031 = vrot.lane.b32.xlu0 %v1024, 16
    %v1032 = vpop.permute.xlu0 %1031
    %1033 = vrot.lane.b32.xlu0 %v1027, 16
    %v1034 = vpop.permute.xlu0 %1033
    %v1037 = vsel %vm221, %v928, %v1032
    %v1038 = vsel %vm221, %v931, %v1034
    %v1039 = vld [vmem:[%s2 + $0x50] sm:$0xff]
    %v1040 = vld [vmem:[%s2 + $0x58] sm:$0xff]
    %v1041 = vld [vmem:[%s2 + $0x60] sm:$0xff]
    %v1042 = vld [vmem:[%s2 + $0x68] sm:$0xff]
    %v1044 = vsel %vm23, %v1037, 0
    %v1047 = vsel %vm23, %v1038, 0
    %1049 = vmatpush.msra.mxu0 0.0
    %1050 = vmatpush.msra.mxu0 0.0
    %1051 = vmatpush.msra.mxu0 0.0
    %1052 = vmatpush.msra.mxu0 0.0
    %1053 = vmatpush.msra.mxu0 0.0
    %1054 = vmatpush.msra.mxu0 0.0
    %1055 = vmatpush.msra.mxu0 0.0
    %1056 = vmatpush.msra.mxu0 0.0
    %1057 = vmatpush.msra.mxu0 0.0
    %1058 = vmatpush.msra.mxu0 0.0
    %1059 = vmatpush.msra.mxu0 0.0
    %1060 = vmatpush.msra.mxu0 0.0
    %1061 = vmatpush.msra.mxu0 %v1042
    %1062 = vmatpush.msra.mxu0 %v1041
    %1063 = vmatpush.msra.mxu0 %v1040
    %1064 = vmatpush.msra.mxu0 %v1039
    %1065 = vmatmul.f32.gmra.mxu0 %v1044
    %v1066 = vpop.f32.mrf.mxu0
    %v1067 = vadd.f32 0.0, %v1066
    %1068 = vmatmul.f32.gmra.mxu0 %v1047
    %v1069 = vpop.f32.mrf.mxu0
    %v1070 = vadd.f32 0.0, %v1069
    %1071 = vdwg.mxu0
    %v1072 = vadd.f32 %v726, %v1067
    %v1073 = vadd.f32 %v727, %v1070
    %v1074 = vld [vmem:[%s1 + $0x109] sm:$0x1]
    %v1075 = vsel %vm23, %v1072, 0.0
    %1076 = vadd.xlane.f32.xlu0 %v1075
    %v1077 = vpop.xlane.xlu0 %1076
    %v1078 = vsel %vm23, %v1073, 0.0
    %1079 = vadd.xlane.f32.xlu0 %v1078
    %v1080 = vpop.xlane.xlu0 %1079
    %v1081 = vmul.f32 %v1077, %v96
    %v1082 = vmul.f32 %v1080, %v96
    %v1083 = vsub.f32 %v1072, %v1081
    %v1084 = vsub.f32 %v1073, %v1082
    %v1085 = vmul.f32 %v1083, %v1083
    %v1086 = vmul.f32 %v1084, %v1084
    %v1087 = vsel %vm23, %v1085, 0.0
    %1088 = vadd.xlane.f32.xlu0 %v1087
    %v1089 = vpop.xlane.xlu0 %1088
    %v1090 = vsel %vm23, %v1086, 0.0
    %1091 = vadd.xlane.f32.xlu0 %v1090
    %v1092 = vpop.xlane.xlu0 %1091
    %v1093 = vmul.f32 %v1089, %v115
    %v1094 = vmul.f32 %v1092, %v115
    %v1095 = vrsqrt.pop %v1093
    %v1096 = vmul.f32 %v1095, %v1093
    %v1097 = vmul.f32 %v1096, %v1095
    %v1098 = vmul.f32 0.5, %v1097
    %v1099 = vsub.f32 1.5, %v1098
    %v1100 = vmul.f32 %v1095, %v1099
    %v1101 = vmul.f32 %v1093, %v1100
    %vm1102 = vcmp.eq.f32.partialorder %v1093, inf
    %v1103 = vsel %vm1102, %v1093, %v1101
    %vm1104 = vcmp.eq.f32.partialorder %v1093, 0.0
    %v1105 = vand.u32 %v1093, 2147483648
    %v1106 = vsel %vm1104, %v1105, %v1103
    %v1107 = vrsqrt.pop %v1094
    %v1108 = vmul.f32 %v1107, %v1094
    %v1109 = vmul.f32 %v1108, %v1107
    %v1110 = vmul.f32 0.5, %v1109
    %v1111 = vsub.f32 1.5, %v1110
    %v1112 = vmul.f32 %v1107, %v1111
    %v1113 = vmul.f32 %v1094, %v1112
    %vm1114 = vcmp.eq.f32.partialorder %v1094, inf
    %v1115 = vsel %vm1114, %v1094, %v1113
    %vm1116 = vcmp.eq.f32.partialorder %v1094, 0.0
    %v1117 = vand.u32 %v1094, 2147483648
    %v1118 = vsel %vm1116, %v1117, %v1115
    %v1119 = vadd.f32 %v1106, 1e-06
    %v1120 = vadd.f32 %v1118, 1e-06
    %v1121 = vrcp.pop %v1119
    %v1122 = vmul.f32 %v1119, %v1121
    %v1123 = vsub.f32 1.0, %v1122
    %v1124 = vmul.f32 %v1121, %v1123
    %v1125 = vadd.f32 %v1121, %v1124
    %vm1126 = vweird.f32 %v1119
    %vm1127 = vweird.f32 %v1121
    %vm1128 = vmor %vm1126, %vm1127
    %v1129 = vsel %vm1128, %v1121, %v1125
    %v1130 = vand.u32 2147483647, %v1119
    %vm1131 = vcmp.eq.f32.partialorder %v1130, 8.507059e+37
    %v1132 = vand.u32 %v1119, 2147483648
    %v1133 = vor.u32 1.1754944e-38, %v1132
    %v1134 = vsel %vm1131, %v1133, %v1129
    %v1135 = vrcp.pop %v1120
    %v1136 = vmul.f32 %v1120, %v1135
    %v1137 = vsub.f32 1.0, %v1136
    %v1138 = vmul.f32 %v1135, %v1137
    %v1139 = vadd.f32 %v1135, %v1138
    %vm1140 = vweird.f32 %v1120
    %vm1141 = vweird.f32 %v1135
    %vm1142 = vmor %vm1140, %vm1141
    %v1143 = vsel %vm1142, %v1135, %v1139
    %v1144 = vand.u32 2147483647, %v1120
    %vm1145 = vcmp.eq.f32.partialorder %v1144, 8.507059e+37
    %v1146 = vand.u32 %v1120, 2147483648
    %v1147 = vor.u32 1.1754944e-38, %v1146
    %v1148 = vsel %vm1145, %v1147, %v1143
    %v1149 = vmul.f32 %v1083, %v1134
    %v1150 = vmul.f32 %v1084, %v1148
    %v1151 = vperm.slane %v1074, 0
    %v1152 = vmul.f32 %v1151, %v1149
    %v1153 = vmul.f32 %v1151, %v1150
    %v1154 = vld [vmem:[%s1 + $0x10a] sm:$0x1]
    %v1155 = vperm.slane %v1154, 0
    %v1156 = vadd.f32 %v1152, %v1155
    %v1157 = vadd.f32 %v1153, %v1155
    %v1158 = vrot.slane %v1156, 7
    %v1159 = vrot.slane %v1157, 7
    %v1160 = vsel %vm537, %v1158, %v1159
    %v1161 = vsel %vm537, %v1159, %v1158
    %v1162 = vsel %vm542, %v1161, 0.0
    %v1163 = vsel %vm543, %v1160, 0.0
    %v1164 = vrot.slane %v1156, 1
    %v1165 = vrot.slane %v1157, 1
    %v1166 = vsel %vm548, %v1164, %v1165
    %v1167 = vsel %vm548, %v1165, %v1164
    %v1168 = vsel %vm553, %v1166, 0.0
    %v1169 = vsel %vm554, %v1167, 0.0
    %1172 = vrot.lane.b32.xlu0 %v1156, 32
    %v1173 = vpop.permute.xlu0 %1172
    %1174 = vrot.lane.b32.xlu0 %v1157, 32
    %v1175 = vpop.permute.xlu0 %1174
    %1180 = vrot.lane.b32.xlu0 %v1168, 64
    %v1181 = vpop.permute.xlu0 %1180
    %1182 = vrot.lane.b32.xlu0 %v1169, 64
    %v1183 = vpop.permute.xlu0 %1182
    %v1186 = vsel %vm23, %v1162, %v1173
    %v1187 = vsel %vm23, %v1163, %v1175
    %v1188 = vsel %vm575, %v1186, %v1181
    %v1189 = vsel %vm575, %v1187, %v1183
    %v1190 = vld [vmem:[%s1 + $0xa0] sm:$0xff]
    %v1191 = vld [vmem:[%s1 + $0xa8] sm:$0xff]
    %v1192 = vld [vmem:[%s1 + $0xb0] sm:$0xff]
    %v1193 = vld [vmem:[%s1 + $0xb8] sm:$0xff]
    %v1194 = vld [vmem:[%s1 + $0xc0] sm:$0xff]
    %v1195 = vld [vmem:[%s1 + $0xc8] sm:$0xff]
    %v1196 = vld [vmem:[%s1 + $0xd0] sm:$0xff]
    %v1197 = vld [vmem:[%s1 + $0xd8] sm:$0xff]
    %v1198 = vld [vmem:[%s1 + $0xe0] sm:$0xff]
    %v1199 = vld [vmem:[%s1 + $0xe8] sm:$0xff]
    %v1200 = vld [vmem:[%s1 + $0xf0] sm:$0xff]
    %v1201 = vld [vmem:[%s1 + $0xf8] sm:$0xff]
    %v1202 = vld [vmem:[%s1 + $0x10b] sm:$0x1]
    %v1203 = vperm.slane %v1202, 0
    %v1205 = vsel %vm592, %v1188, 0
    %v1208 = vsel %vm592, %v1189, 0
    %1210 = vmatpush.msra.mxu0 0.0
    %1211 = vmatpush.msra.mxu0 0.0
    %1212 = vmatpush.msra.mxu0 0.0
    %1213 = vmatpush.msra.mxu0 0.0
    %1214 = vmatpush.msra.mxu0 %v1201
    %1215 = vmatpush.msra.mxu0 %v1200
    %1216 = vmatpush.msra.mxu0 %v1199
    %1217 = vmatpush.msra.mxu0 %v1198
    %1218 = vmatpush.msra.mxu0 %v1197
    %1219 = vmatpush.msra.mxu0 %v1196
    %1220 = vmatpush.msra.mxu0 %v1195
    %1221 = vmatpush.msra.mxu0 %v1194
    %1222 = vmatpush.msra.mxu0 %v1193
    %1223 = vmatpush.msra.mxu0 %v1192
    %1224 = vmatpush.msra.mxu0 %v1191
    %1225 = vmatpush.msra.mxu0 %v1190
    %1226 = vmatmul.f32.gmra.mxu0 %v1205
    %v1227 = vpop.f32.mrf.mxu0
    %v1228 = vadd.f32 %v1203, %v1227
    %1229 = vmatmul.f32.gmra.mxu0 %v1208
    %v1230 = vpop.f32.mrf.mxu0
    %v1231 = vadd.f32 %v1203, %v1230
    %1232 = vdwg.mxu0
    %v1233 = vmax.f32 %v1228, 0.0
    %v1234 = vmax.f32 %v1231, 0.0
    %v1235 = vrot.slane %v1233, 7
    %v1236 = vrot.slane %v1234, 7
    %v1237 = vsel %vm537, %v1235, %v1236
    %v1238 = vsel %vm537, %v1236, %v1235
    %v1239 = vsel %vm542, %v1238, 0.0
    %v1240 = vsel %vm543, %v1237, 0.0
    %v1241 = vrot.slane %v1233, 1
    %v1242 = vrot.slane %v1234, 1
    %v1243 = vsel %vm548, %v1241, %v1242
    %v1244 = vsel %vm548, %v1242, %v1241
    %v1245 = vsel %vm553, %v1243, 0.0
    %v1246 = vsel %vm554, %v1244, 0.0
    %1249 = vrot.lane.b32.xlu0 %v1233, 64
    %v1250 = vpop.permute.xlu0 %1249
    %1251 = vrot.lane.b32.xlu0 %v1234, 64
    %v1252 = vpop.permute.xlu0 %1251
    %v1255 = vsel %vm575, %v1239, %v1250
    %v1256 = vsel %vm575, %v1240, %v1252
    %v1257 = vld [vmem:[%s2 + $0x130] sm:$0xff]
    %v1258 = vld [vmem:[%s2 + $0x138] sm:$0xff]
    %v1259 = vld [vmem:[%s2 + $0x140] sm:$0xff]
    %v1260 = vld [vmem:[%s2 + $0x148] sm:$0xff]
    %v1261 = vld [vmem:[%s2 + $0x150] sm:$0xff]
    %v1262 = vld [vmem:[%s2 + $0x158] sm:$0xff]
    %v1263 = vld [vmem:[%s2 + $0x160] sm:$0xff]
    %v1264 = vld [vmem:[%s2 + $0x168] sm:$0xff]
    %v1265 = vld [vmem:[%s2 + $0x170] sm:$0xff]
    %v1266 = vld [vmem:[%s2 + $0x178] sm:$0xff]
    %v1267 = vld [vmem:[%s2 + $0x180] sm:$0xff]
    %v1268 = vld [vmem:[%s2 + $0x188] sm:$0xff]
    %v1269 = vld [vmem:[%s2 + $0x190] sm:$0xff]
    %v1270 = vld [vmem:[%s2 + $0x198] sm:$0xff]
    %v1271 = vld [vmem:[%s2 + $0x1a0] sm:$0xff]
    %v1272 = vld [vmem:[%s2 + $0x1a8] sm:$0xff]
    %v1273 = vld [vmem:[%s2 + $0x1b0] sm:$0xff]
    %v1274 = vld [vmem:[%s2 + $0x1b8] sm:$0xff]
    %v1275 = vld [vmem:[%s2 + $0x1c0] sm:$0xff]
    %v1276 = vld [vmem:[%s2 + $0x1c8] sm:$0xff]
    %v1277 = vld [vmem:[%s2 + $0x1d0] sm:$0xff]
    %v1278 = vld [vmem:[%s2 + $0x1d8] sm:$0xff]
    %v1279 = vld [vmem:[%s2 + $0x1e0] sm:$0xff]
    %v1280 = vld [vmem:[%s2 + $0x1e8] sm:$0xff]
    %v1281 = vld [vmem:[%s1 + $0x10c] sm:$0x1]
    %v1282 = vperm.slane %v1281, 0
    %v1284 = vsel %vm575, %v1245, 0
    %v1287 = vsel %vm575, %v1246, 0
    %1289 = vmatpush.msra.mxu0 %v1272
    %1290 = vmatpush.msra.mxu0 %v1271
    %1291 = vmatpush.msra.mxu0 %v1270
    %1292 = vmatpush.msra.mxu0 %v1269
    %1293 = vmatpush.msra.mxu0 %v1268
    %1294 = vmatpush.msra.mxu0 %v1267
    %1295 = vmatpush.msra.mxu0 %v1266
    %1296 = vmatpush.msra.mxu0 %v1265
    %1297 = vmatpush.msra.mxu0 %v1264
    %1298 = vmatpush.msra.mxu0 %v1263
    %1299 = vmatpush.msra.mxu0 %v1262
    %1300 = vmatpush.msra.mxu0 %v1261
    %1301 = vmatpush.msra.mxu0 %v1260
    %1302 = vmatpush.msra.mxu0 %v1259
    %1303 = vmatpush.msra.mxu0 %v1258
    %1304 = vmatpush.msra.mxu0 %v1257
    %1305 = vmatmul.f32.gmra.mxu0 %v1255
    %v1306 = vpop.f32.mrf.mxu0
    %v1307 = vadd.f32 %v1282, %v1306
    %1308 = vmatmul.f32.gmra.mxu0 %v1256
    %v1309 = vpop.f32.mrf.mxu0
    %v1310 = vadd.f32 %v1282, %v1309
    %1311 = vdwg.mxu0
    %1312 = vmatpush.msra.mxu0 0.0
    %1313 = vmatpush.msra.mxu0 0.0
    %1314 = vmatpush.msra.mxu0 0.0
    %1315 = vmatpush.msra.mxu0 0.0
    %1316 = vmatpush.msra.mxu0 0.0
    %1317 = vmatpush.msra.mxu0 0.0
    %1318 = vmatpush.msra.mxu0 0.0
    %1319 = vmatpush.msra.mxu0 0.0
    %1320 = vmatpush.msra.mxu0 %v1280
    %1321 = vmatpush.msra.mxu0 %v1279
    %1322 = vmatpush.msra.mxu0 %v1278
    %1323 = vmatpush.msra.mxu0 %v1277
    %1324 = vmatpush.msra.mxu0 %v1276
    %1325 = vmatpush.msra.mxu0 %v1275
    %1326 = vmatpush.msra.mxu0 %v1274
    %1327 = vmatpush.msra.mxu0 %v1273
    %1328 = vmatmul.f32.gmra.mxu0 %v1284
    %v1329 = vpop.f32.mrf.mxu0
    %v1330 = vadd.f32 %v1307, %v1329
    %1331 = vmatmul.f32.gmra.mxu0 %v1287
    %v1332 = vpop.f32.mrf.mxu0
    %v1333 = vadd.f32 %v1310, %v1332
    %1334 = vdwg.mxu0
    %v1335 = vmax.f32 %v1330, 0.0
    %v1336 = vmax.f32 %v1333, 0.0
    %v1337 = vadd.f32 %v1072, %v1335
    %v1338 = vadd.f32 %v1073, %v1336
    %v1339 = vld [vmem:[%s1 + $0x110] sm:$0x1]
    %v1340 = vsel %vm23, %v1337, 0.0
    %1341 = vadd.xlane.f32.xlu0 %v1340
    %v1342 = vpop.xlane.xlu0 %1341
    %v1343 = vsel %vm23, %v1338, 0.0
    %1344 = vadd.xlane.f32.xlu0 %v1343
    %v1345 = vpop.xlane.xlu0 %1344
    %v1346 = vmul.f32 %v1342, %v96
    %v1347 = vmul.f32 %v1345, %v96
    %v1348 = vsub.f32 %v1337, %v1346
    %v1349 = vsub.f32 %v1338, %v1347
    %v1350 = vmul.f32 %v1348, %v1348
    %v1351 = vmul.f32 %v1349, %v1349
    %v1352 = vsel %vm23, %v1350, 0.0
    %1353 = vadd.xlane.f32.xlu0 %v1352
    %v1354 = vpop.xlane.xlu0 %1353
    %v1355 = vsel %vm23, %v1351, 0.0
    %1356 = vadd.xlane.f32.xlu0 %v1355
    %v1357 = vpop.xlane.xlu0 %1356
    %v1358 = vmul.f32 %v1354, %v115
    %v1359 = vmul.f32 %v1357, %v115
    %v1360 = vrsqrt.pop %v1358
    %v1361 = vmul.f32 %v1360, %v1358
    %v1362 = vmul.f32 %v1361, %v1360
    %v1363 = vmul.f32 0.5, %v1362
    %v1364 = vsub.f32 1.5, %v1363
    %v1365 = vmul.f32 %v1360, %v1364
    %v1366 = vmul.f32 %v1358, %v1365
    %vm1367 = vcmp.eq.f32.partialorder %v1358, inf
    %v1368 = vsel %vm1367, %v1358, %v1366
    %vm1369 = vcmp.eq.f32.partialorder %v1358, 0.0
    %v1370 = vand.u32 %v1358, 2147483648
    %v1371 = vsel %vm1369, %v1370, %v1368
    %v1372 = vrsqrt.pop %v1359
    %v1373 = vmul.f32 %v1372, %v1359
    %v1374 = vmul.f32 %v1373, %v1372
    %v1375 = vmul.f32 0.5, %v1374
    %v1376 = vsub.f32 1.5, %v1375
    %v1377 = vmul.f32 %v1372, %v1376
    %v1378 = vmul.f32 %v1359, %v1377
    %vm1379 = vcmp.eq.f32.partialorder %v1359, inf
    %v1380 = vsel %vm1379, %v1359, %v1378
    %vm1381 = vcmp.eq.f32.partialorder %v1359, 0.0
    %v1382 = vand.u32 %v1359, 2147483648
    %v1383 = vsel %vm1381, %v1382, %v1380
    %v1384 = vadd.f32 %v1371, 1e-06
    %v1385 = vadd.f32 %v1383, 1e-06
    %v1386 = vrcp.pop %v1384
    %v1387 = vmul.f32 %v1384, %v1386
    %v1388 = vsub.f32 1.0, %v1387
    %v1389 = vmul.f32 %v1386, %v1388
    %v1390 = vadd.f32 %v1386, %v1389
    %vm1391 = vweird.f32 %v1384
    %vm1392 = vweird.f32 %v1386
    %vm1393 = vmor %vm1391, %vm1392
    %v1394 = vsel %vm1393, %v1386, %v1390
    %v1395 = vand.u32 2147483647, %v1384
    %vm1396 = vcmp.eq.f32.partialorder %v1395, 8.507059e+37
    %v1397 = vand.u32 %v1384, 2147483648
    %v1398 = vor.u32 1.1754944e-38, %v1397
    %v1399 = vsel %vm1396, %v1398, %v1394
    %v1400 = vrcp.pop %v1385
    %v1401 = vmul.f32 %v1385, %v1400
    %v1402 = vsub.f32 1.0, %v1401
    %v1403 = vmul.f32 %v1400, %v1402
    %v1404 = vadd.f32 %v1400, %v1403
    %vm1405 = vweird.f32 %v1385
    %vm1406 = vweird.f32 %v1400
    %vm1407 = vmor %vm1405, %vm1406
    %v1408 = vsel %vm1407, %v1400, %v1404
    %v1409 = vand.u32 2147483647, %v1385
    %vm1410 = vcmp.eq.f32.partialorder %v1409, 8.507059e+37
    %v1411 = vand.u32 %v1385, 2147483648
    %v1412 = vor.u32 1.1754944e-38, %v1411
    %v1413 = vsel %vm1410, %v1412, %v1408
    %v1414 = vmul.f32 %v1348, %v1399
    %v1415 = vmul.f32 %v1349, %v1413
    %v1416 = vperm.slane %v1339, 0
    %v1417 = vmul.f32 %v1416, %v1414
    %v1418 = vmul.f32 %v1416, %v1415
    %v1419 = vld [vmem:[%s1 + $0x111] sm:$0x1]
    %v1420 = vperm.slane %v1419, 0
    %v1421 = vadd.f32 %v1417, %v1420
    %v1422 = vadd.f32 %v1418, %v1420
    %1423 = vst.msk [vmem:[#allocation2] sm:$0xff] %vm23, %v1421
    %1424 = vst.msk [vmem:[#allocation2 + $0x8] sm:$0xff] %vm23, %v1422
    // Predicated region
    $region14: #{emotion_encoder.1} parent=1 // pred_check
      _
    $region15: #{emotion_encoder.1} parent=1 // pred_check_branch
      %1426 = sbr.rel (0) target = $region17
    $region16: #{emotion_encoder.1} parent=1 // pred_region
      %1428 = vsyncadd [#allocation3], 0
      %s1429 = sshll.u32 [#allocation2], 4
      %s1430 = int_to_ptr.vmem [resolvable:$true] %s1429
      %s1431 = sshll.u32 %s3, 4
      %s1432 = int_to_ptr.hbm [resolvable:$true] %s1431
      %1437 = dma.vmem_to_hbm [thread:$0]  %s1430, 256, %s1432, [#allocation3], 128, 128, 8
    $region17: #{emotion_encoder.1} parent=1 // pred_fallthru
      _
    // Predicated region
    $region18: #{emotion_encoder.1} parent=1 // pred_check
      _
    $region19: #{emotion_encoder.1} parent=1 // pred_check_branch
      %1439 = sbr.rel (0) target = $region21
    $region20: #{emotion_encoder.1} parent=1 // pred_region
      %1441 = dma.done [#allocation3], 256
    $region21: #{emotion_encoder.1} parent=1 // pred_fallthru
      _
    %1442 = vsyncpa [#allocation3], 1

</llo_original>
